<compile_context>
chip_gen: v7x
topology: tpu7x:2x2x1
jax: 0.10.0
libtpu: 0.0.40
codegen_flags: <defaults>
</compile_context>

<pallas_src>
import jax
import jax.numpy as jnp
from jax.experimental import pallas as pl
from jax.experimental.pallas import tpu as pltpu

_OUT_PAD = 8  # padded logits / output lane width (real out_dim = 3)


def _round_up(n, m):
    return ((n + m - 1) // m) * m


def _mish(x):
    """mish(x) = x * tanh(softplus(x)), exact rational form, ONE exp.

    With t = exp(-|x|):
      x >= 0: tanh(softplus(x)) = (1 + 2t) / (1 + 2t + 2t^2)
      x <  0: tanh(softplus(x)) = (2t + t^2) / (2 + 2t + t^2)
    Numerator/denominator are selected first, then a single EUP reciprocal
    estimate + one Newton step replaces both full f32 divides (review item #1).
    Denominators are always >= 1, so the reciprocal is safe.
    """
    t = jnp.exp(-jnp.abs(x))
    pos = x >= 0.0
    num = jnp.where(pos, 1.0 + 2.0 * t, (2.0 + t) * t)
    den = num + jnp.where(pos, 2.0 * (t * t), 2.0)
    r = pl.reciprocal(den, approx=True)   # EUP slot (cheap)
    r = r * (2.0 - den * r)               # one Newton step -> ~f32 accuracy
    return x * (num * r)


def _mlp_kernel(x_ref, w1_ref, b1_ref, w2_ref, b2_ref, w3_ref, b3_ref, o_ref):
    hi = jax.lax.Precision.HIGHEST  # true-f32 MXU path for the f32 compute mode

    # Cast the streamed x tile to the matmul compute dtype in VMEM/vregs
    # (avoids a wrapper-side HBM read+write pass over x).
    x = x_ref[...].astype(w1_ref.dtype)

    # linear1 (+ dropout1 = identity in eval) + mish1
    h1 = jnp.dot(x, w1_ref[...], preferred_element_type=jnp.float32,
                 precision=hi) + b1_ref[...]
    h1 = _mish(h1).astype(w2_ref.dtype)

    # (dropout2 = identity in eval) + linear2 + mish2
    h2 = jnp.dot(h1, w2_ref[...], preferred_element_type=jnp.float32,
                 precision=hi) + b2_ref[...]
    h2 = _mish(h2).astype(w3_ref.dtype)

    # linear3 (padded to _OUT_PAD lanes) + softmax(dim=1). Padded lanes carry a
    # -1e30 bias so exp() -> 0 exactly and they do not perturb the row sum.
    logits = jnp.dot(h2, w3_ref[...], preferred_element_type=jnp.float32,
                     precision=hi) + b3_ref[...]
    m = jnp.max(logits, axis=-1, keepdims=True)
    e = jnp.exp(logits - m)
    s = jnp.sum(e, axis=-1, keepdims=True)
    # Exact normalization (review correctness concern): the divide only touches
    # a (tb, 1) tensor, so its VALU cost is negligible.
    inv = 1.0 / s
    o_ref[...] = (e * inv).astype(o_ref.dtype)


def prepare_params(params, *, compute_dtype=jnp.float32):
    """One-time param prep (hoisted out of the per-call forward path).

    Casts matmul operands to compute_dtype (bf16 halves HBM/VMEM traffic on
    v6e/v7x; biases stay f32) and pads the 3-wide last layer to _OUT_PAD lanes
    (zero weight columns, -1e30 bias on pad lanes so they vanish under softmax).
    """
    w1, b1 = params["w1"], params["b1"]   # (68, i), (1, i)
    w2, b2 = params["w2"], params["b2"]   # (i, j),  (1, j)
    w3, b3 = params["w3"], params["b3"]   # (j, 3),  (1, 3)
    out_dim = w3.shape[1]
    w3p = jnp.zeros((w3.shape[0], _OUT_PAD), w3.dtype).at[:, :out_dim].set(w3)
    b3p = jnp.full((1, _OUT_PAD), -1e30, jnp.float32).at[:, :out_dim].set(
        b3.astype(jnp.float32))
    return {
        "w1": w1.astype(compute_dtype), "b1": b1.astype(jnp.float32),
        "w2": w2.astype(compute_dtype), "b2": b2.astype(jnp.float32),
        "w3": w3p.astype(compute_dtype), "b3": b3p,
        "out_dim": out_dim,
    }


def threelinear_forward(x, kparams, *, block_b=1024, vmem_limit_bytes=None):
    """Fused forward. x: (B, 68); kparams: output of prepare_params()."""
    w1, b1 = kparams["w1"], kparams["b1"]
    w2, b2 = kparams["w2"], kparams["b2"]
    w3, b3 = kparams["w3"], kparams["b3"]
    out_dim = kparams["out_dim"]
    B, f_in = x.shape

    # Batch tile: multiple of 8 sublanes, no larger than the rounded-up batch.
    tb = min(_round_up(block_b, 8), _round_up(B, 8))
    if vmem_limit_bytes is None:
        # Cap so 2x(x,out) blocks + ~4 (tb,128) f32 intermediates + resident
        # weights stay well under every generation's default scoped VMEM.
        tb = min(tb, 2048)
    grid = (pl.cdiv(B, tb),)  # ragged batch tail masked by Pallas (no jnp.pad)

    resident = lambda a: pl.BlockSpec(a.shape, lambda i: (0, 0))

    out = pl.pallas_call(
        _mlp_kernel,
        out_shape=jax.ShapeDtypeStruct((B, _OUT_PAD), jnp.float32),
        grid=grid,
        in_specs=[
            pl.BlockSpec((tb, f_in), lambda i: (i, 0)),   # x: streamed per tile
            resident(w1), resident(b1),                   # weights/biases resident
            resident(w2), resident(b2),
            resident(w3), resident(b3),
        ],
        out_specs=pl.BlockSpec((tb, _OUT_PAD), lambda i: (i, 0)),
        compiler_params=pltpu.CompilerParams(
            dimension_semantics=("parallel",),   # shards batch over v7x's 2 TCs
            vmem_limit_bytes=vmem_limit_bytes),
    )(x, w1, b1, w2, b2, w3, b3)

    return out[:, :out_dim]


def init_params(key, i, j):
    """PyTorch nn.Linear-style init: U(-1/sqrt(fan_in), +1/sqrt(fan_in))."""
    def linear(k, fan_in, fan_out):
        kw, kb = jax.random.split(k)
        bound = 1.0 / jnp.sqrt(fan_in)
        w = jax.random.uniform(kw, (fan_in, fan_out), jnp.float32, -bound, bound)
        b = jax.random.uniform(kb, (1, fan_out), jnp.float32, -bound, bound)
        return w, b

    k1, k2, k3 = jax.random.split(key, 3)
    w1, b1 = linear(k1, 68, i)
    w2, b2 = linear(k2, i, j)
    w3, b3 = linear(k3, j, 3)
    return {"w1": w1, "b1": b1, "w2": w2, "b2": b2, "w3": w3, "b3": b3}


def reference_forward(x, params):
    hi = jax.lax.Precision.HIGHEST
    def mish(v):
        return v * jnp.tanh(jax.nn.softplus(v))
    h1 = mish(jnp.dot(x, params["w1"], precision=hi) + params["b1"])
    h2 = mish(jnp.dot(h1, params["w2"], precision=hi) + params["b2"])
    logits = jnp.dot(h2, params["w3"], precision=hi) + params["b3"]
    return jax.nn.softmax(logits, axis=1)


if __name__ == "__main__":
    key = jax.random.PRNGKey(0)
    kx, kp = jax.random.split(key)

    # batch deliberately NOT a multiple of the tile; 128-wide hidden layers.
    B, I, J = 52, 128, 128
    x = jax.random.normal(kx, (B, 68), jnp.float32)
    params = init_params(kp, I, J)
    ref = reference_forward(x, params)

    # f32 compute path with a small batch tile -> multi-step grid + ragged tail.
    p_f32 = prepare_params(params, compute_dtype=jnp.float32)
    out_f32 = jax.block_until_ready(threelinear_forward(x, p_f32, block_b=16))
    assert out_f32.shape == (B, 3)
    assert jnp.allclose(out_f32, ref, atol=2e-3, rtol=2e-3), "f32 kernel mismatch"
    assert jnp.allclose(jnp.sum(out_f32, axis=1), 1.0, atol=1e-3), "rows must sum to ~1"

    # bf16 matmul-operand path (f32 accumulation) -- bandwidth-saving mode.
    p_bf16 = prepare_params(params, compute_dtype=jnp.bfloat16)
    out_bf16 = jax.block_until_ready(threelinear_forward(x, p_bf16))
    assert out_bf16.shape == (B, 3)
    assert jnp.allclose(out_bf16, ref, atol=5e-2, rtol=5e-2), "bf16 kernel mismatch"

    print("KERNEL_OK")
</pallas_src>

<mosaic_0001>
module attributes {stable_mosaic.version = 11 : i64} {
  func.func @_mlp_kernel(%arg0: i32, %arg1: memref<16x68xf32, #tpu.memory_space<vmem>>, %arg2: memref<68x128xf32, #tpu.memory_space<vmem>>, %arg3: memref<1x128xf32, #tpu.memory_space<vmem>>, %arg4: memref<128x128xf32, #tpu.memory_space<vmem>>, %arg5: memref<1x128xf32, #tpu.memory_space<vmem>>, %arg6: memref<128x8xf32, #tpu.memory_space<vmem>>, %arg7: memref<1x8xf32, #tpu.memory_space<vmem>>, %arg8: memref<16x8xf32, #tpu.memory_space<vmem>>) attributes {dimension_semantics = [#tpu.dimension_semantics<parallel>], iteration_bounds = array<i64: 4>, scalar_prefetch = 0 : i64, scratch_operands = 0 : i64, tpu.core_type = #tpu.core_type<tc>, window_params = [{transform_indices = @transform_0, window_bounds = array<i64: 16, 68>}, {pipeline_mode = #tpu.pipeline_mode<synchronous>, transform_indices = @transform_1, window_bounds = array<i64: 68, 128>}, {pipeline_mode = #tpu.pipeline_mode<synchronous>, transform_indices = @transform_2, window_bounds = array<i64: 1, 128>}, {pipeline_mode = #tpu.pipeline_mode<synchronous>, transform_indices = @transform_3, window_bounds = array<i64: 128, 128>}, {pipeline_mode = #tpu.pipeline_mode<synchronous>, transform_indices = @transform_4, window_bounds = array<i64: 1, 128>}, {pipeline_mode = #tpu.pipeline_mode<synchronous>, transform_indices = @transform_5, window_bounds = array<i64: 128, 8>}, {pipeline_mode = #tpu.pipeline_mode<synchronous>, transform_indices = @transform_6, window_bounds = array<i64: 1, 8>}, {transform_indices = @transform_7, window_bounds = array<i64: 16, 8>}]} {
    %c0 = arith.constant 0 : index
    %c0_0 = arith.constant 0 : index
    %0 = vector.load %arg1[%c0, %c0_0] : memref<16x68xf32, #tpu.memory_space<vmem>>, vector<16x68xf32>
    %c0_1 = arith.constant 0 : index
    %c0_2 = arith.constant 0 : index
    %1 = vector.load %arg2[%c0_1, %c0_2] : memref<68x128xf32, #tpu.memory_space<vmem>>, vector<68x128xf32>
    %cst = arith.constant dense<0.000000e+00> : vector<16x128xf32>
    %2 = tpu.matmul %0, %1, %cst {dimension_numbers = #tpu.dot_dimension_numbers<[1], [0], [0], [1], [0, 0, 1, 1], [], []>, precision = #tpu.contract_precision<fp32>} : vector<16x68xf32>, vector<68x128xf32>, vector<16x128xf32> -> vector<16x128xf32>
    %c0_3 = arith.constant 0 : index
    %c0_4 = arith.constant 0 : index
    %3 = vector.load %arg3[%c0_3, %c0_4] : memref<1x128xf32, #tpu.memory_space<vmem>>, vector<1x128xf32>
    %4 = vector.broadcast %3 : vector<1x128xf32> to vector<16x128xf32>
    %5 = arith.addf %2, %4 : vector<16x128xf32>
    %6 = math.absf %5 : vector<16x128xf32>
    %cst_5 = arith.constant 0.000000e+00 : f32
    %7 = vector.broadcast %cst_5 : f32 to vector<16x128xf32>
    %8 = arith.subf %7, %6 : vector<16x128xf32>
    %9 = math.exp %8 : vector<16x128xf32>
    %cst_6 = arith.constant 0.000000e+00 : f32
    %10 = vector.broadcast %cst_6 : f32 to vector<16x128xf32>
    %11 = arith.cmpf oge, %5, %10 : vector<16x128xf32>
    %cst_7 = arith.constant 2.000000e+00 : f32
    %12 = vector.broadcast %cst_7 : f32 to vector<16x128xf32>
    %13 = arith.mulf %12, %9 : vector<16x128xf32>
    %cst_8 = arith.constant 1.000000e+00 : f32
    %14 = vector.broadcast %cst_8 : f32 to vector<16x128xf32>
    %15 = arith.addf %14, %13 : vector<16x128xf32>
    %cst_9 = arith.constant 2.000000e+00 : f32
    %16 = vector.broadcast %cst_9 : f32 to vector<16x128xf32>
    %17 = arith.addf %16, %9 : vector<16x128xf32>
    %18 = arith.mulf %17, %9 : vector<16x128xf32>
    %19 = arith.select %11, %15, %18 : vector<16x128xi1>, vector<16x128xf32>
    %20 = arith.mulf %9, %9 : vector<16x128xf32>
    %cst_10 = arith.constant 2.000000e+00 : f32
    %21 = vector.broadcast %cst_10 : f32 to vector<16x128xf32>
    %22 = arith.mulf %21, %20 : vector<16x128xf32>
    %cst_11 = arith.constant 2.000000e+00 : f32
    %23 = vector.broadcast %cst_11 : f32 to vector<16x128xf32>
    %24 = arith.select %11, %22, %23 : vector<16x128xi1>, vector<16x128xf32>
    %25 = arith.addf %19, %24 : vector<16x128xf32>
    %26 = tpu.reciprocal %25 {approx = true} : vector<16x128xf32> -> vector<16x128xf32>
    %27 = arith.mulf %25, %26 : vector<16x128xf32>
    %cst_12 = arith.constant 2.000000e+00 : f32
    %28 = vector.broadcast %cst_12 : f32 to vector<16x128xf32>
    %29 = arith.subf %28, %27 : vector<16x128xf32>
    %30 = arith.mulf %26, %29 : vector<16x128xf32>
    %31 = arith.mulf %19, %30 : vector<16x128xf32>
    %32 = arith.mulf %5, %31 : vector<16x128xf32>
    %c0_13 = arith.constant 0 : index
    %c0_14 = arith.constant 0 : index
    %33 = vector.load %arg4[%c0_13, %c0_14] : memref<128x128xf32, #tpu.memory_space<vmem>>, vector<128x128xf32>
    %cst_15 = arith.constant dense<0.000000e+00> : vector<16x128xf32>
    %34 = tpu.matmul %32, %33, %cst_15 {dimension_numbers = #tpu.dot_dimension_numbers<[1], [0], [0], [1], [0, 0, 1, 1], [], []>, precision = #tpu.contract_precision<fp32>} : vector<16x128xf32>, vector<128x128xf32>, vector<16x128xf32> -> vector<16x128xf32>
    %c0_16 = arith.constant 0 : index
    %c0_17 = arith.constant 0 : index
    %35 = vector.load %arg5[%c0_16, %c0_17] : memref<1x128xf32, #tpu.memory_space<vmem>>, vector<1x128xf32>
    %36 = vector.broadcast %35 : vector<1x128xf32> to vector<16x128xf32>
    %37 = arith.addf %34, %36 : vector<16x128xf32>
    %38 = math.absf %37 : vector<16x128xf32>
    %cst_18 = arith.constant 0.000000e+00 : f32
    %39 = vector.broadcast %cst_18 : f32 to vector<16x128xf32>
    %40 = arith.subf %39, %38 : vector<16x128xf32>
    %41 = math.exp %40 : vector<16x128xf32>
    %cst_19 = arith.constant 0.000000e+00 : f32
    %42 = vector.broadcast %cst_19 : f32 to vector<16x128xf32>
    %43 = arith.cmpf oge, %37, %42 : vector<16x128xf32>
    %cst_20 = arith.constant 2.000000e+00 : f32
    %44 = vector.broadcast %cst_20 : f32 to vector<16x128xf32>
    %45 = arith.mulf %44, %41 : vector<16x128xf32>
    %cst_21 = arith.constant 1.000000e+00 : f32
    %46 = vector.broadcast %cst_21 : f32 to vector<16x128xf32>
    %47 = arith.addf %46, %45 : vector<16x128xf32>
    %cst_22 = arith.constant 2.000000e+00 : f32
    %48 = vector.broadcast %cst_22 : f32 to vector<16x128xf32>
    %49 = arith.addf %48, %41 : vector<16x128xf32>
    %50 = arith.mulf %49, %41 : vector<16x128xf32>
    %51 = arith.select %43, %47, %50 : vector<16x128xi1>, vector<16x128xf32>
    %52 = arith.mulf %41, %41 : vector<16x128xf32>
    %cst_23 = arith.constant 2.000000e+00 : f32
    %53 = vector.broadcast %cst_23 : f32 to vector<16x128xf32>
    %54 = arith.mulf %53, %52 : vector<16x128xf32>
    %cst_24 = arith.constant 2.000000e+00 : f32
    %55 = vector.broadcast %cst_24 : f32 to vector<16x128xf32>
    %56 = arith.select %43, %54, %55 : vector<16x128xi1>, vector<16x128xf32>
    %57 = arith.addf %51, %56 : vector<16x128xf32>
    %58 = tpu.reciprocal %57 {approx = true} : vector<16x128xf32> -> vector<16x128xf32>
    %59 = arith.mulf %57, %58 : vector<16x128xf32>
    %cst_25 = arith.constant 2.000000e+00 : f32
    %60 = vector.broadcast %cst_25 : f32 to vector<16x128xf32>
    %61 = arith.subf %60, %59 : vector<16x128xf32>
    %62 = arith.mulf %58, %61 : vector<16x128xf32>
    %63 = arith.mulf %51, %62 : vector<16x128xf32>
    %64 = arith.mulf %37, %63 : vector<16x128xf32>
    %c0_26 = arith.constant 0 : index
    %c0_27 = arith.constant 0 : index
    %65 = vector.load %arg6[%c0_26, %c0_27] : memref<128x8xf32, #tpu.memory_space<vmem>>, vector<128x8xf32>
    %cst_28 = arith.constant dense<0.000000e+00> : vector<16x8xf32>
    %66 = tpu.matmul %64, %65, %cst_28 {dimension_numbers = #tpu.dot_dimension_numbers<[1], [0], [0], [1], [0, 0, 1, 1], [], []>, precision = #tpu.contract_precision<fp32>} : vector<16x128xf32>, vector<128x8xf32>, vector<16x8xf32> -> vector<16x8xf32>
    %c0_29 = arith.constant 0 : index
    %c0_30 = arith.constant 0 : index
    %67 = vector.load %arg7[%c0_29, %c0_30] : memref<1x8xf32, #tpu.memory_space<vmem>>, vector<1x8xf32>
    %68 = vector.broadcast %67 : vector<1x8xf32> to vector<16x8xf32>
    %69 = arith.addf %66, %68 : vector<16x8xf32>
    %cst_31 = arith.constant dense<0xFF800000> : vector<16xf32>
    %70 = vector.multi_reduction <maximumf>, %69, %cst_31 [1] : vector<16x8xf32> to vector<16xf32>
    %71 = vector.shape_cast %70 : vector<16xf32> to vector<16x1xf32>
    %72 = vector.broadcast %71 : vector<16x1xf32> to vector<16x8xf32>
    %73 = arith.subf %69, %72 : vector<16x8xf32>
    %74 = math.exp %73 : vector<16x8xf32>
    %cst_32 = arith.constant dense<0.000000e+00> : vector<16xf32>
    %75 = vector.multi_reduction <add>, %74, %cst_32 [1] : vector<16x8xf32> to vector<16xf32>
    %76 = vector.shape_cast %75 : vector<16xf32> to vector<16x1xf32>
    %cst_33 = arith.constant 1.000000e+00 : f32
    %77 = vector.broadcast %cst_33 : f32 to vector<16x1xf32>
    %78 = arith.divf %77, %76 : vector<16x1xf32>
    %79 = vector.broadcast %78 : vector<16x1xf32> to vector<16x8xf32>
    %80 = arith.mulf %74, %79 : vector<16x8xf32>
    %c0_34 = arith.constant 0 : index
    %c0_35 = arith.constant 0 : index
    %81 = vector.load %arg8[%c0_34, %c0_35] : memref<16x8xf32, #tpu.memory_space<vmem>>, vector<16x8xf32>
    tpu.vector_store %arg8[%c0_34, %c0_35], %80 {strides = array<i32>} : memref<16x8xf32, #tpu.memory_space<vmem>>, vector<16x8xf32>,
    return
  }
  func.func @transform_0(%arg0: i32) -> (i32, i32) {
    %c0_i32 = arith.constant 0 : i32
    %c0_i32_0 = arith.constant 0 : i32
    return %arg0, %c0_i32 : i32, i32
  }
  func.func @transform_1(%arg0: i32) -> (i32, i32) {
    %c0_i32 = arith.constant 0 : i32
    %c0_i32_0 = arith.constant 0 : i32
    %c0_i32_1 = arith.constant 0 : i32
    return %c0_i32, %c0_i32_0 : i32, i32
  }
  func.func @transform_2(%arg0: i32) -> (i32, i32) {
    %c0_i32 = arith.constant 0 : i32
    %c0_i32_0 = arith.constant 0 : i32
    %c0_i32_1 = arith.constant 0 : i32
    return %c0_i32, %c0_i32_0 : i32, i32
  }
  func.func @transform_3(%arg0: i32) -> (i32, i32) {
    %c0_i32 = arith.constant 0 : i32
    %c0_i32_0 = arith.constant 0 : i32
    %c0_i32_1 = arith.constant 0 : i32
    return %c0_i32, %c0_i32_0 : i32, i32
  }
  func.func @transform_4(%arg0: i32) -> (i32, i32) {
    %c0_i32 = arith.constant 0 : i32
    %c0_i32_0 = arith.constant 0 : i32
    %c0_i32_1 = arith.constant 0 : i32
    return %c0_i32, %c0_i32_0 : i32, i32
  }
  func.func @transform_5(%arg0: i32) -> (i32, i32) {
    %c0_i32 = arith.constant 0 : i32
    %c0_i32_0 = arith.constant 0 : i32
    %c0_i32_1 = arith.constant 0 : i32
    return %c0_i32, %c0_i32_0 : i32, i32
  }
  func.func @transform_6(%arg0: i32) -> (i32, i32) {
    %c0_i32 = arith.constant 0 : i32
    %c0_i32_0 = arith.constant 0 : i32
    %c0_i32_1 = arith.constant 0 : i32
    return %c0_i32, %c0_i32_0 : i32, i32
  }
  func.func @transform_7(%arg0: i32) -> (i32, i32) {
    %c0_i32 = arith.constant 0 : i32
    %c0_i32_0 = arith.constant 0 : i32
    return %arg0, %c0_i32 : i32, i32
  }
}

</mosaic_0001>

<llo_original>
// kernel: tpu_custom_call.1
$region0: #{tpu_custom_call.1}
  #allocation0 [shape = 'u32[]', space=smem, size = 0x4, offset = 0x4, fixed_abs, tag = 'smem constant byte address 0x4 - core index']
  #allocation1 [shape = 'u32[144,128]{1,0:T(1,128)}', space=vmem, size = 0x12000, scoped, tag = 'internal scratch']
  %s0 = inlined_call_operand.hbm [shape: f32[52,68], index: 0, kind: input, shape index: {}]
  %s1 = inlined_call_operand.hbm [shape: f32[68,128], index: 1, kind: input, shape index: {}]
  %s2 = inlined_call_operand.vmem [shape: f32[1,128], index: 2, kind: input, shape index: {}]
  %s3 = inlined_call_operand.vmem [shape: f32[128,128], index: 3, kind: input, shape index: {}]
  %s4 = inlined_call_operand.vmem [shape: f32[1,128], index: 4, kind: input, shape index: {}]
  %s5 = inlined_call_operand.vmem [shape: f32[128,8], index: 5, kind: input, shape index: {}]
  %s6 = inlined_call_operand.vmem [shape: f32[1,8], index: 6, kind: input, shape index: {}]
  %s7 = inlined_call_operand.vmem [shape: f32[52,8], index: 7, kind: output, shape index: {}]
  %s8 = sld [smem:[#allocation0]]
  $region117: #{tpu_custom_call.1} parent=0
    _
  %s10 = ssub.s32 1, %s8
  %s11 = scalar_select 0, %s10, %s8
  $region1: #{tpu_custom_call.1} parent=0
    #allocation2 [shape = 'u8[16384]{0}', space=vmem, size = 0x4000, scoped, tag = 'input window, operand 0']
    #allocation3 [shape = 's32[2]{0}', space=sflag, size = 0x8, scoped, tag = 'scoped memory for tpu_custom_call.1']
    #allocation4 [shape = 'u8[36864]{0}', space=vmem, size = 0x9000, scoped, tag = 'input window, operand 1, single buffered']
    #allocation5 [shape = 's32[1]{0}', space=sflag, size = 0x4, scoped, tag = 'scoped memory for tpu_custom_call.1']
    #allocation6 [shape = 'u8[16384]{0}', space=vmem, size = 0x4000, scoped, tag = 'output window, operand 0']
    %12 = vsyncpa [#allocation3], 0
    %s13 = scalar_lea.sflag [#allocation3], 1
    %14 = vsyncpa %s13, 0
    %15 = vsyncpa [#allocation5], 0
    loop: start=0, step=1, limit=6
    $region2: #{tpu_custom_call.1} parent=1 // loop_pre_header
      _
    $region3: #{tpu_custom_call.1} parent=1 // loop_header
      %s17 = sphi 0, %s21
      %p18 = scmp.ge.s32.totalorder %s17, 6
      %s27 = sphi 0, %s29
      %s30 = sphi 0, %s27
      %s31 = sphi 0, %s30
      %s47 = sphi 0, %s31
      %s51 = sphi 0, %s51
      %s53 = sphi 0, %s51
      %s54 = sphi 0, %s53
      %s68 = sphi 0, %s54
      %s72 = sphi 0, %s72
      %s74 = sphi 0, %s72
      %s75 = sphi 0, %s74
      %s89 = sphi 0, %s75
      %s93 = sphi 0, %s93
      %s95 = sphi 0, %s93
      %s96 = sphi 0, %s95
      %s110 = sphi 0, %s96
      %s114 = sphi 0, %s114
      %s116 = sphi 0, %s114
      %s117 = sphi 0, %s116
      %s131 = sphi 0, %s117
      %s135 = sphi 0, %s135
      %s137 = sphi 0, %s135
      %s138 = sphi 0, %s137
      %s152 = sphi 0, %s138
      %s156 = sphi 0, %s156
      %s158 = sphi 0, %s156
      %s159 = sphi 0, %s158
      %s173 = sphi 0, %s159
      %s179 = sphi 0, %s181
      %s182 = sphi 0, %s179
      %s183 = sphi 0, %s182
      %s199 = sphi 0, %s183
    $region4: #{tpu_custom_call.1} parent=1 // loop_header_branch
      %20 = sbr.rel (%p18) target = $region8
    $region5: #{tpu_custom_call.1} parent=1 // loop_body
      %s22 = ssub.s32 %s17, 1
      %s23 = ssub.s32 %s17, 2
      %s24 = sadd.s32 %s17, 1
      %s25 = ssub.s32 %s17, %s24
      %p26 = scmp.eq.s32.totalorder %s25, 0
      %s28 = sadd.s32 %s27, 1
      %s29 = scalar_select %p26, %s27, %s28
      %p32 = pneg %p26
      %p33 = scmp.eq.s32.totalorder %s17, 3
      %p34 = por %p32, %p33
      %p35 = scmp.ne.s32.totalorder %s27, %s30
      %p36 = scmp.eq.s32.totalorder %s17, 0
      %p37 = por %p35, %p36
      %p38 = scmp.ne.s32.totalorder %s27, %s30
      %p39 = scmp.eq.s32.totalorder %s22, 3
      %p40 = por %p38, %p39
      %p41 = scmp.ne.s32.totalorder %s30, %s31
      %p42 = scmp.eq.s32.totalorder %s22, 0
      %p43 = por %p41, %p42
      %p44 = scmp.ne.s32.totalorder %s30, %s31
      %p45 = scmp.eq.s32.totalorder %s23, 3
      %p46 = por %p44, %p45
      %p48 = scmp.ne.s32.totalorder %s31, %s47
      %p49 = scmp.eq.s32.totalorder %s23, 0
      %p50 = por %p48, %p49
      %s52 = sadd.s32 %s51, 1
      %p55 = scmp.eq.s32.totalorder %s17, 3
      %p56 = scmp.ne.s32.totalorder %s51, %s53
      %p57 = scmp.eq.s32.totalorder %s17, 0
      %p58 = por %p56, %p57
      %p59 = scmp.ne.s32.totalorder %s51, %s53
      %p60 = scmp.eq.s32.totalorder %s22, 3
      %p61 = por %p59, %p60
      %p62 = scmp.ne.s32.totalorder %s53, %s54
      %p63 = scmp.eq.s32.totalorder %s22, 0
      %p64 = por %p62, %p63
      %p65 = scmp.ne.s32.totalorder %s53, %s54
      %p66 = scmp.eq.s32.totalorder %s23, 3
      %p67 = por %p65, %p66
      %p69 = scmp.ne.s32.totalorder %s54, %s68
      %p70 = scmp.eq.s32.totalorder %s23, 0
      %p71 = por %p69, %p70
      %s73 = sadd.s32 %s72, 1
      %p76 = scmp.eq.s32.totalorder %s17, 3
      %p77 = scmp.ne.s32.totalorder %s72, %s74
      %p78 = scmp.eq.s32.totalorder %s17, 0
      %p79 = por %p77, %p78
      %p80 = scmp.ne.s32.totalorder %s72, %s74
      %p81 = scmp.eq.s32.totalorder %s22, 3
      %p82 = por %p80, %p81
      %p83 = scmp.ne.s32.totalorder %s74, %s75
      %p84 = scmp.eq.s32.totalorder %s22, 0
      %p85 = por %p83, %p84
      %p86 = scmp.ne.s32.totalorder %s74, %s75
      %p87 = scmp.eq.s32.totalorder %s23, 3
      %p88 = por %p86, %p87
      %p90 = scmp.ne.s32.totalorder %s75, %s89
      %p91 = scmp.eq.s32.totalorder %s23, 0
      %p92 = por %p90, %p91
      %s94 = sadd.s32 %s93, 1
      %p97 = scmp.eq.s32.totalorder %s17, 3
      %p98 = scmp.ne.s32.totalorder %s93, %s95
      %p99 = scmp.eq.s32.totalorder %s17, 0
      %p100 = por %p98, %p99
      %p101 = scmp.ne.s32.totalorder %s93, %s95
      %p102 = scmp.eq.s32.totalorder %s22, 3
      %p103 = por %p101, %p102
      %p104 = scmp.ne.s32.totalorder %s95, %s96
      %p105 = scmp.eq.s32.totalorder %s22, 0
      %p106 = por %p104, %p105
      %p107 = scmp.ne.s32.totalorder %s95, %s96
      %p108 = scmp.eq.s32.totalorder %s23, 3
      %p109 = por %p107, %p108
      %p111 = scmp.ne.s32.totalorder %s96, %s110
      %p112 = scmp.eq.s32.totalorder %s23, 0
      %p113 = por %p111, %p112
      %s115 = sadd.s32 %s114, 1
      %p118 = scmp.eq.s32.totalorder %s17, 3
      %p119 = scmp.ne.s32.totalorder %s114, %s116
      %p120 = scmp.eq.s32.totalorder %s17, 0
      %p121 = por %p119, %p120
      %p122 = scmp.ne.s32.totalorder %s114, %s116
      %p123 = scmp.eq.s32.totalorder %s22, 3
      %p124 = por %p122, %p123
      %p125 = scmp.ne.s32.totalorder %s116, %s117
      %p126 = scmp.eq.s32.totalorder %s22, 0
      %p127 = por %p125, %p126
      %p128 = scmp.ne.s32.totalorder %s116, %s117
      %p129 = scmp.eq.s32.totalorder %s23, 3
      %p130 = por %p128, %p129
      %p132 = scmp.ne.s32.totalorder %s117, %s131
      %p133 = scmp.eq.s32.totalorder %s23, 0
      %p134 = por %p132, %p133
      %s136 = sadd.s32 %s135, 1
      %p139 = scmp.eq.s32.totalorder %s17, 3
      %p140 = scmp.ne.s32.totalorder %s135, %s137
      %p141 = scmp.eq.s32.totalorder %s17, 0
      %p142 = por %p140, %p141
      %p143 = scmp.ne.s32.totalorder %s135, %s137
      %p144 = scmp.eq.s32.totalorder %s22, 3
      %p145 = por %p143, %p144
      %p146 = scmp.ne.s32.totalorder %s137, %s138
      %p147 = scmp.eq.s32.totalorder %s22, 0
      %p148 = por %p146, %p147
      %p149 = scmp.ne.s32.totalorder %s137, %s138
      %p150 = scmp.eq.s32.totalorder %s23, 3
      %p151 = por %p149, %p150
      %p153 = scmp.ne.s32.totalorder %s138, %s152
      %p154 = scmp.eq.s32.totalorder %s23, 0
      %p155 = por %p153, %p154
      %s157 = sadd.s32 %s156, 1
      %p160 = scmp.eq.s32.totalorder %s17, 3
      %p161 = scmp.ne.s32.totalorder %s156, %s158
      %p162 = scmp.eq.s32.totalorder %s17, 0
      %p163 = por %p161, %p162
      %p164 = scmp.ne.s32.totalorder %s156, %s158
      %p165 = scmp.eq.s32.totalorder %s22, 3
      %p166 = por %p164, %p165
      %p167 = scmp.ne.s32.totalorder %s158, %s159
      %p168 = scmp.eq.s32.totalorder %s22, 0
      %p169 = por %p167, %p168
      %p170 = scmp.ne.s32.totalorder %s158, %s159
      %p171 = scmp.eq.s32.totalorder %s23, 3
      %p172 = por %p170, %p171
      %p174 = scmp.ne.s32.totalorder %s159, %s173
      %p175 = scmp.eq.s32.totalorder %s23, 0
      %p176 = por %p174, %p175
      %s177 = ssub.s32 %s17, %s24
      %p178 = scmp.eq.s32.totalorder %s177, 0
      %s180 = sadd.s32 %s179, 1
      %s181 = scalar_select %p178, %s179, %s180
      %p184 = pneg %p178
      %p185 = scmp.eq.s32.totalorder %s17, 3
      %p186 = por %p184, %p185
      %p187 = scmp.ne.s32.totalorder %s179, %s182
      %p188 = scmp.eq.s32.totalorder %s17, 0
      %p189 = por %p187, %p188
      %p190 = scmp.ne.s32.totalorder %s179, %s182
      %p191 = scmp.eq.s32.totalorder %s22, 3
      %p192 = por %p190, %p191
      %p193 = scmp.ne.s32.totalorder %s182, %s183
      %p194 = scmp.eq.s32.totalorder %s22, 0
      %p195 = por %p193, %p194
      %p196 = scmp.ne.s32.totalorder %s182, %s183
      %p197 = scmp.eq.s32.totalorder %s23, 3
      %p198 = por %p196, %p197
      %p200 = scmp.ne.s32.totalorder %s183, %s199
      %p201 = scmp.eq.s32.totalorder %s23, 0
      %p202 = por %p200, %p201
      %p203 = scmp.le.s32.totalorder 1, %s17
      %p204 = scmp.lt.s32.totalorder %s17, 5
      %p205 = pnand %p203, %p204
      %p206 = pneg %p205
      // Predicated region
      $region9: #{tpu_custom_call.1} parent=5 // pred_check
        _
      $region10: #{tpu_custom_call.1} parent=5 // pred_check_branch
        %208 = sbr.rel (%p205) target = $region12
      $region11: #{tpu_custom_call.1} parent=5 // pred_region
        %s209 = ssub.s32 %s17, 1
        // Predicated region
        $region13: #{tpu_custom_call.1} parent=11 // pred_check
          %p210 = pneg %p64
        $region14: #{tpu_custom_call.1} parent=11 // pred_check_branch
          %212 = sbr.rel (%p210) target = $region16
        $region15: #{tpu_custom_call.1} parent=11 // pred_region
          %s214 = ssub.s32 1152, 1152
          %215 = vsyncadd [#allocation5], %s214
          %s216 = sshll.u32 [#allocation4], 4
          %s217 = int_to_ptr.vmem [resolvable:$true] %s216
          %222 = dma.hbm_to_vmem [thread:$0]  %s1, 1152, %s217, [#allocation5], 128, 128, 8
        $region16: #{tpu_custom_call.1} parent=11 // pred_fallthru
          _
        // Predicated region
        $region17: #{tpu_custom_call.1} parent=11 // pred_check
          %p223 = pneg %p85
        $region18: #{tpu_custom_call.1} parent=11 // pred_check_branch
          %225 = sbr.rel (%p223) target = $region20
        $region19: #{tpu_custom_call.1} parent=11 // pred_region
          _
        $region20: #{tpu_custom_call.1} parent=11 // pred_fallthru
          _
        // Predicated region
        $region21: #{tpu_custom_call.1} parent=11 // pred_check
          %p226 = pneg %p106
        $region22: #{tpu_custom_call.1} parent=11 // pred_check_branch
          %228 = sbr.rel (%p226) target = $region24
        $region23: #{tpu_custom_call.1} parent=11 // pred_region
          _
        $region24: #{tpu_custom_call.1} parent=11 // pred_fallthru
          _
        // Predicated region
        $region25: #{tpu_custom_call.1} parent=11 // pred_check
          %p229 = pneg %p127
        $region26: #{tpu_custom_call.1} parent=11 // pred_check_branch
          %231 = sbr.rel (%p229) target = $region28
        $region27: #{tpu_custom_call.1} parent=11 // pred_region
          _
        $region28: #{tpu_custom_call.1} parent=11 // pred_fallthru
          _
        // Predicated region
        $region29: #{tpu_custom_call.1} parent=11 // pred_check
          %p232 = pneg %p148
        $region30: #{tpu_custom_call.1} parent=11 // pred_check_branch
          %234 = sbr.rel (%p232) target = $region32
        $region31: #{tpu_custom_call.1} parent=11 // pred_region
          _
        $region32: #{tpu_custom_call.1} parent=11 // pred_fallthru
          _
        // Predicated region
        $region33: #{tpu_custom_call.1} parent=11 // pred_check
          %p235 = pneg %p169
        $region34: #{tpu_custom_call.1} parent=11 // pred_check_branch
          %237 = sbr.rel (%p235) target = $region36
        $region35: #{tpu_custom_call.1} parent=11 // pred_region
          _
        $region36: #{tpu_custom_call.1} parent=11 // pred_fallthru
          _
      $region12: #{tpu_custom_call.1} parent=5 // pred_fallthru
        _
      %p238 = scmp.lt.s32.totalorder %s17, 4
      // Predicated region
      $region37: #{tpu_custom_call.1} parent=5 // pred_check
        %p239 = pneg %p238
      $region38: #{tpu_custom_call.1} parent=5 // pred_check_branch
        %241 = sbr.rel (%p239) target = $region40
      $region39: #{tpu_custom_call.1} parent=5 // pred_region
        // Predicated region
        $region41: #{tpu_custom_call.1} parent=39 // pred_check
          %p242 = pneg %p37
        $region42: #{tpu_custom_call.1} parent=39 // pred_check_branch
          %244 = sbr.rel (%p242) target = $region44
        $region43: #{tpu_custom_call.1} parent=39 // pred_region
          %s245 = sand.u32 %s27, 1
          %s246 = scalar_lea.sflag [#allocation3], %s245
          %s247 = sand.u32 %s27, 1
          %s248 = smul.addr %s247, 16
          %s249 = scalar_lea.vmem [#allocation2], %s248
          %s250 = smul.u32 2, %s17
          %s251 = ssub.s32 7, %s250
          %p252 = scmp.lt.s32.totalorder %s251, 2
          %s253 = scalar_select %p252, %s251, 2
          %s254 = smul.u32 128, %s253
          %s256 = ssub.s32 256, %s254
          %257 = vsyncadd %s246, %s256
          %p258 = scmp.ne.s32.totalorder 0, %s254
          %s259 = smul.addr %s250, 128
          %s260 = scalar_lea.hbm %s0, %s259
          %s261 = smul.u32 8, %s253
          %s262 = sshll.u32 %s249, 4
          %s263 = int_to_ptr.vmem [resolvable:$true] %s262
          %s264 = sshll.u32 %s261, 4
          %268 = dma.hbm_to_vmem [thread:$0]  (%p258), %s260, %s264, %s263, %s246, 128, 128, 8
        $region44: #{tpu_custom_call.1} parent=39 // pred_fallthru
          _
      $region40: #{tpu_custom_call.1} parent=5 // pred_fallthru
        _
      %p269 = scmp.le.s32.totalorder 1, %s17
      %p270 = scmp.lt.s32.totalorder %s17, 5
      %p271 = pnand %p269, %p270
      %p272 = pneg %p271
      // Predicated region
      $region45: #{tpu_custom_call.1} parent=5 // pred_check
        _
      $region46: #{tpu_custom_call.1} parent=5 // pred_check_branch
        %274 = sbr.rel (%p271) target = $region48
      $region47: #{tpu_custom_call.1} parent=5 // pred_region
        %s275 = ssub.s32 %s17, 1
        %s276 = sand.u32 %s30, 1
        %s277 = scalar_lea.sflag [#allocation3], %s276
        %s278 = sand.u32 %s30, 1
        %s279 = smul.addr %s278, 16
        %s280 = scalar_lea.vmem [#allocation2], %s279
        // Predicated region
        $region49: #{tpu_custom_call.1} parent=47 // pred_check
          %p281 = pneg %p43
        $region50: #{tpu_custom_call.1} parent=47 // pred_check_branch
          %283 = sbr.rel (%p281) target = $region52
        $region51: #{tpu_custom_call.1} parent=47 // pred_region
          %284 = dma.done %s277, 256
        $region52: #{tpu_custom_call.1} parent=47 // pred_fallthru
          _
        // Predicated region
        $region53: #{tpu_custom_call.1} parent=47 // pred_check
          %p285 = pneg %p64
        $region54: #{tpu_custom_call.1} parent=47 // pred_check_branch
          %287 = sbr.rel (%p285) target = $region56
        $region55: #{tpu_custom_call.1} parent=47 // pred_region
          %288 = dma.done [#allocation5], 1152
        $region56: #{tpu_custom_call.1} parent=47 // pred_fallthru
          _
        %s289 = sand.u32 %s30, 1
        %s290 = scalar_lea.sflag [#allocation3], %s289
        %s291 = sand.u32 %s30, 1
        %s292 = smul.addr %s291, 16
        %s293 = scalar_lea.vmem [#allocation2], %s292
        %p294 = pneg %p43
        %p295 = pneg %p40
        %p296 = pneg %p64
        %p297 = pneg %p61
        %p298 = pneg %p85
        %p299 = pneg %p82
        %p300 = pneg %p106
        %p301 = pneg %p103
        %p302 = pneg %p127
        %p303 = pneg %p124
        %p304 = pneg %p148
        %p305 = pneg %p145
        %p306 = pneg %p169
        %p307 = pneg %p166
        %p308 = pneg %p195
        %p309 = pneg %p192
        %s310 = sand.u32 %s182, 1
        %s311 = sand.u32 %s182, 1
        %s312 = smul.addr %s311, 16
        %s313 = scalar_lea.vmem [#allocation6], %s312
        %s314 = smul.u32 2, %s22
        %s315 = ssub.s32 7, %s314
        %p316 = scmp.lt.s32.totalorder %s315, 2
        %s317 = scalar_select %p316, %s315, 2
        %s318 = smul.u32 128, %s317
        %s319 = smul.u32 2, %s22
        %s320 = ssub.s32 7, %s319
        %p321 = scmp.lt.s32.totalorder %s320, 2
        %s322 = scalar_select %p321, %s320, 2
        %s323 = smul.u32 128, %s322
        %v324 = vld [vmem:[%s280] sm:$0xff]
        %v325 = vld [vmem:[%s280 + $0x8] sm:$0xff]
        %v326 = vld [vmem:[#allocation4] sm:$0xff]
        %v327 = vld [vmem:[#allocation4 + $0x8] sm:$0xff]
        %v328 = vld [vmem:[#allocation4 + $0x10] sm:$0xff]
        %v329 = vld [vmem:[#allocation4 + $0x18] sm:$0xff]
        %v330 = vld [vmem:[#allocation4 + $0x20] sm:$0xff]
        %v331 = vld [vmem:[#allocation4 + $0x28] sm:$0xff]
        %v332 = vld [vmem:[#allocation4 + $0x30] sm:$0xff]
        %v333 = vld [vmem:[#allocation4 + $0x38] sm:$0xff]
        %v334 = vld [vmem:[#allocation4 + $0x40] sm:$0xf]
        %v335 = vld [vmem:[%s2] sm:$0x1]
        %v337 = vlaneseq
        %v338 = vshrl.u32 %v337, 7
        %v339 = vsub.s32 0, %v338
        %v340 = vrot.slane %v335, %v339
        %vm342 = vcmask 556032
        %v344 = vsel %vm342, %v324, 0
        %v347 = vsel %vm342, %v325, 0
        %vm349 = vcmask 1043456
        %v351 = vsel %vm349, %v334, 0
        %353 = vmatprep.subr.mxu0 0.0
        %v354 = vand.u32 %v326, 4294901760
        %355 = vmatpush1.msra.mxu0 %v354
        %356 = vmatprep.subr.mxu0 0.0
        %v357 = vand.u32 %v327, 4294901760
        %358 = vmatpush1.msra.mxu0 %v357
        %359 = vmatprep.subr.mxu0 0.0
        %v360 = vand.u32 %v328, 4294901760
        %361 = vmatpush1.msra.mxu0 %v360
        %362 = vmatprep.subr.mxu0 0.0
        %v363 = vand.u32 %v329, 4294901760
        %364 = vmatpush1.msra.mxu0 %v363
        %365 = vmatprep.subr.mxu0 0.0
        %v366 = vand.u32 %v330, 4294901760
        %367 = vmatpush1.msra.mxu0 %v366
        %368 = vmatprep.subr.mxu0 0.0
        %v369 = vand.u32 %v331, 4294901760
        %370 = vmatpush1.msra.mxu0 %v369
        %371 = vmatprep.subr.mxu0 0.0
        %v372 = vand.u32 %v332, 4294901760
        %373 = vmatpush1.msra.mxu0 %v372
        %374 = vmatprep.subr.mxu0 0.0
        %v375 = vand.u32 %v333, 4294901760
        %376 = vmatpush1.msra.mxu0 %v375
        %377 = vmatprep.subr.mxu0 0.0
        %v378 = vand.u32 %v351, 4294901760
        %379 = vmatpush1.msra.mxu0 %v378
        %380 = vmatprep.subr.mxu0 0.0
        %381 = vmatpush1.msra.mxu0 0.0
        %382 = vmatprep.subr.mxu0 0.0
        %383 = vmatpush1.msra.mxu0 0.0
        %384 = vmatprep.subr.mxu0 0.0
        %385 = vmatpush1.msra.mxu0 0.0
        %386 = vmatprep.subr.mxu0 0.0
        %387 = vmatpush1.msra.mxu0 0.0
        %388 = vmatprep.subr.mxu0 0.0
        %389 = vmatpush1.msra.mxu0 0.0
        %390 = vmatprep.subr.mxu0 0.0
        %391 = vmatpush1.msra.mxu0 0.0
        %392 = vmatprep.subr.mxu0 0.0
        %393 = vmatpush1.msra.mxu0 0.0
        %394 = vmatprep.subr.mxu0 0.0
        %395 = vmatpush1.msra.mxu0 0.0
        %396 = vmatprep.subr.mxu0 0.0
        %397 = vmatpush1.msra.mxu0 0.0
        %398 = vmatprep.subr.mxu0 0.0
        %399 = vmatpush1.msra.mxu0 0.0
        %400 = vmatprep.subr.mxu0 0.0
        %401 = vmatpush1.msra.mxu0 0.0
        %402 = vmatprep.subr.mxu0 0.0
        %403 = vmatpush1.msra.mxu0 0.0
        %404 = vmatprep.subr.mxu0 0.0
        %405 = vmatpush1.msra.mxu0 0.0
        %406 = vmatprep.subr.mxu0 0.0
        %407 = vmatpush1.msra.mxu0 0.0
        %408 = vmatprep.subr.mxu0 0.0
        %409 = vmatpush1.msra.mxu0 0.0
        %410 = vmatprep.subr.mxu0 0.0
        %411 = vmatpush1.msra.mxu0 0.0
        %412 = vmatprep.subr.mxu0 0.0
        %413 = vmatpush1.msra.mxu0 0.0
        %414 = vmatprep.subr.mxu0 0.0
        %415 = vmatpush1.msra.mxu0 0.0
        %416 = vmatprep.subr.mxu0 0.0
        %417 = vmatpush1.msra.mxu0 0.0
        %418 = vmatprep.subr.mxu0 0.0
        %419 = vmatpush1.msra.mxu0 0.0
        %420 = vmatprep.subr.mxu0 0.0
        %421 = vmatpush1.msra.mxu0 0.0
        %422 = vmatprep.subr.mxu0 0.0
        %423 = vmatpush1.msra.mxu0 0.0
        %424 = vmatprep.subr.mxu0 0.0
        %425 = vmatpush1.msra.mxu0 0.0
        %426 = vmatprep.mubr.f32.mxu0 0.0
        %v427 = vand.u32 %v344, 4294901760
        %v428 = vsub.f32 %v344, %v427
        %v429 = vand.u32 %v428, 4294901760
        %v430 = vsub.f32 %v428, %v429
        %v431 = vand.u32 %v430, 4294901760
        %432 = vmatmul.mubr.f32.gmra.mrb[0].mxu0 %v431
        %v433 = vpop.f32.mrb[0].mxu0
        %v434 = vadd.f32 %v340, %v433
        %v435 = vpop.f32.mrb[0].mxu0
        %436 = vmatprep.mubr.f32.mxu0 0.0
        %v437 = vand.u32 %v347, 4294901760
        %v438 = vsub.f32 %v347, %v437
        %v439 = vand.u32 %v438, 4294901760
        %v440 = vsub.f32 %v438, %v439
        %v441 = vand.u32 %v440, 4294901760
        %442 = vmatmul.mubr.f32.gmra.mrb[0].mxu0 %v441
        %v443 = vpop.f32.mrb[0].mxu0
        %v444 = vadd.f32 %v340, %v443
        %v445 = vpop.f32.mrb[0].mxu0
        %446 = vdwg.mxu0
        %447 = vmatprep.subr.mxu0 0.0
        %v448 = vand.u32 %v326, 4294901760
        %v449 = vsub.f32 %v326, %v448
        %v450 = vand.u32 %v449, 4294901760
        %v451 = vsub.f32 %v449, %v450
        %v452 = vand.u32 %v451, 4294901760
        %453 = vmatpush1.msra.mxu0 %v452
        %454 = vmatprep.subr.mxu0 0.0
        %v455 = vand.u32 %v327, 4294901760
        %v456 = vsub.f32 %v327, %v455
        %v457 = vand.u32 %v456, 4294901760
        %v458 = vsub.f32 %v456, %v457
        %v459 = vand.u32 %v458, 4294901760
        %460 = vmatpush1.msra.mxu0 %v459
        %461 = vmatprep.subr.mxu0 0.0
        %v462 = vand.u32 %v328, 4294901760
        %v463 = vsub.f32 %v328, %v462
        %v464 = vand.u32 %v463, 4294901760
        %v465 = vsub.f32 %v463, %v464
        %v466 = vand.u32 %v465, 4294901760
        %467 = vmatpush1.msra.mxu0 %v466
        %468 = vmatprep.subr.mxu0 0.0
        %v469 = vand.u32 %v329, 4294901760
        %v470 = vsub.f32 %v329, %v469
        %v471 = vand.u32 %v470, 4294901760
        %v472 = vsub.f32 %v470, %v471
        %v473 = vand.u32 %v472, 4294901760
        %474 = vmatpush1.msra.mxu0 %v473
        %475 = vmatprep.subr.mxu0 0.0
        %v476 = vand.u32 %v330, 4294901760
        %v477 = vsub.f32 %v330, %v476
        %v478 = vand.u32 %v477, 4294901760
        %v479 = vsub.f32 %v477, %v478
        %v480 = vand.u32 %v479, 4294901760
        %481 = vmatpush1.msra.mxu0 %v480
        %482 = vmatprep.subr.mxu0 0.0
        %v483 = vand.u32 %v331, 4294901760
        %v484 = vsub.f32 %v331, %v483
        %v485 = vand.u32 %v484, 4294901760
        %v486 = vsub.f32 %v484, %v485
        %v487 = vand.u32 %v486, 4294901760
        %488 = vmatpush1.msra.mxu0 %v487
        %489 = vmatprep.subr.mxu0 0.0
        %v490 = vand.u32 %v332, 4294901760
        %v491 = vsub.f32 %v332, %v490
        %v492 = vand.u32 %v491, 4294901760
        %v493 = vsub.f32 %v491, %v492
        %v494 = vand.u32 %v493, 4294901760
        %495 = vmatpush1.msra.mxu0 %v494
        %496 = vmatprep.subr.mxu0 0.0
        %v497 = vand.u32 %v333, 4294901760
        %v498 = vsub.f32 %v333, %v497
        %v499 = vand.u32 %v498, 4294901760
        %v500 = vsub.f32 %v498, %v499
        %v501 = vand.u32 %v500, 4294901760
        %502 = vmatpush1.msra.mxu0 %v501
        %503 = vmatprep.subr.mxu0 0.0
        %v504 = vand.u32 %v351, 4294901760
        %v505 = vsub.f32 %v351, %v504
        %v506 = vand.u32 %v505, 4294901760
        %v507 = vsub.f32 %v505, %v506
        %v508 = vand.u32 %v507, 4294901760
        %509 = vmatpush1.msra.mxu0 %v508
        %510 = vmatprep.subr.mxu0 0.0
        %511 = vmatpush1.msra.mxu0 0.0
        %512 = vmatprep.subr.mxu0 0.0
        %513 = vmatpush1.msra.mxu0 0.0
        %514 = vmatprep.subr.mxu0 0.0
        %515 = vmatpush1.msra.mxu0 0.0
        %516 = vmatprep.subr.mxu0 0.0
        %517 = vmatpush1.msra.mxu0 0.0
        %518 = vmatprep.subr.mxu0 0.0
        %519 = vmatpush1.msra.mxu0 0.0
        %520 = vmatprep.subr.mxu0 0.0
        %521 = vmatpush1.msra.mxu0 0.0
        %522 = vmatprep.subr.mxu0 0.0
        %523 = vmatpush1.msra.mxu0 0.0
        %524 = vmatprep.subr.mxu0 0.0
        %525 = vmatpush1.msra.mxu0 0.0
        %526 = vmatprep.subr.mxu0 0.0
        %527 = vmatpush1.msra.mxu0 0.0
        %528 = vmatprep.subr.mxu0 0.0
        %529 = vmatpush1.msra.mxu0 0.0
        %530 = vmatprep.subr.mxu0 0.0
        %531 = vmatpush1.msra.mxu0 0.0
        %532 = vmatprep.subr.mxu0 0.0
        %533 = vmatpush1.msra.mxu0 0.0
        %534 = vmatprep.subr.mxu0 0.0
        %535 = vmatpush1.msra.mxu0 0.0
        %536 = vmatprep.subr.mxu0 0.0
        %537 = vmatpush1.msra.mxu0 0.0
        %538 = vmatprep.subr.mxu0 0.0
        %539 = vmatpush1.msra.mxu0 0.0
        %540 = vmatprep.subr.mxu0 0.0
        %541 = vmatpush1.msra.mxu0 0.0
        %542 = vmatprep.subr.mxu0 0.0
        %543 = vmatpush1.msra.mxu0 0.0
        %544 = vmatprep.subr.mxu0 0.0
        %545 = vmatpush1.msra.mxu0 0.0
        %546 = vmatprep.subr.mxu0 0.0
        %547 = vmatpush1.msra.mxu0 0.0
        %548 = vmatprep.subr.mxu0 0.0
        %549 = vmatpush1.msra.mxu0 0.0
        %550 = vmatprep.subr.mxu0 0.0
        %551 = vmatpush1.msra.mxu0 0.0
        %552 = vmatprep.subr.mxu0 0.0
        %553 = vmatpush1.msra.mxu0 0.0
        %554 = vmatprep.subr.mxu0 0.0
        %555 = vmatpush1.msra.mxu0 0.0
        %556 = vmatprep.mubr.f32.mxu0 0.0
        %v557 = vand.u32 %v344, 4294901760
        %558 = vmatmul.mubr.f32.gmra.mrb[0].mxu0 %v557
        %v559 = vpop.f32.mrb[0].mxu0
        %v560 = vadd.f32 %v434, %v559
        %v561 = vpop.f32.mrb[0].mxu0
        %562 = vmatprep.mubr.f32.mxu0 0.0
        %v563 = vand.u32 %v347, 4294901760
        %564 = vmatmul.mubr.f32.gmra.mrb[0].mxu0 %v563
        %v565 = vpop.f32.mrb[0].mxu0
        %v566 = vadd.f32 %v444, %v565
        %v567 = vpop.f32.mrb[0].mxu0
        %568 = vdwg.mxu0
        %569 = vmatprep.subr.mxu0 0.0
        %v570 = vand.u32 %v326, 4294901760
        %v571 = vsub.f32 %v326, %v570
        %572 = vmatpush1.msra.mxu0 %v571
        %573 = vmatprep.subr.mxu0 0.0
        %v574 = vand.u32 %v327, 4294901760
        %v575 = vsub.f32 %v327, %v574
        %576 = vmatpush1.msra.mxu0 %v575
        %577 = vmatprep.subr.mxu0 0.0
        %v578 = vand.u32 %v328, 4294901760
        %v579 = vsub.f32 %v328, %v578
        %580 = vmatpush1.msra.mxu0 %v579
        %581 = vmatprep.subr.mxu0 0.0
        %v582 = vand.u32 %v329, 4294901760
        %v583 = vsub.f32 %v329, %v582
        %584 = vmatpush1.msra.mxu0 %v583
        %585 = vmatprep.subr.mxu0 0.0
        %v586 = vand.u32 %v330, 4294901760
        %v587 = vsub.f32 %v330, %v586
        %588 = vmatpush1.msra.mxu0 %v587
        %589 = vmatprep.subr.mxu0 0.0
        %v590 = vand.u32 %v331, 4294901760
        %v591 = vsub.f32 %v331, %v590
        %592 = vmatpush1.msra.mxu0 %v591
        %593 = vmatprep.subr.mxu0 0.0
        %v594 = vand.u32 %v332, 4294901760
        %v595 = vsub.f32 %v332, %v594
        %596 = vmatpush1.msra.mxu0 %v595
        %597 = vmatprep.subr.mxu0 0.0
        %v598 = vand.u32 %v333, 4294901760
        %v599 = vsub.f32 %v333, %v598
        %600 = vmatpush1.msra.mxu0 %v599
        %601 = vmatprep.subr.mxu0 0.0
        %v602 = vand.u32 %v351, 4294901760
        %v603 = vsub.f32 %v351, %v602
        %604 = vmatpush1.msra.mxu0 %v603
        %605 = vmatprep.subr.mxu0 0.0
        %606 = vmatpush1.msra.mxu0 0.0
        %607 = vmatprep.subr.mxu0 0.0
        %608 = vmatpush1.msra.mxu0 0.0
        %609 = vmatprep.subr.mxu0 0.0
        %610 = vmatpush1.msra.mxu0 0.0
        %611 = vmatprep.subr.mxu0 0.0
        %612 = vmatpush1.msra.mxu0 0.0
        %613 = vmatprep.subr.mxu0 0.0
        %614 = vmatpush1.msra.mxu0 0.0
        %615 = vmatprep.subr.mxu0 0.0
        %616 = vmatpush1.msra.mxu0 0.0
        %617 = vmatprep.subr.mxu0 0.0
        %618 = vmatpush1.msra.mxu0 0.0
        %619 = vmatprep.subr.mxu0 0.0
        %620 = vmatpush1.msra.mxu0 0.0
        %621 = vmatprep.subr.mxu0 0.0
        %622 = vmatpush1.msra.mxu0 0.0
        %623 = vmatprep.subr.mxu0 0.0
        %624 = vmatpush1.msra.mxu0 0.0
        %625 = vmatprep.subr.mxu0 0.0
        %626 = vmatpush1.msra.mxu0 0.0
        %627 = vmatprep.subr.mxu0 0.0
        %628 = vmatpush1.msra.mxu0 0.0
        %629 = vmatprep.subr.mxu0 0.0
        %630 = vmatpush1.msra.mxu0 0.0
        %631 = vmatprep.subr.mxu0 0.0
        %632 = vmatpush1.msra.mxu0 0.0
        %633 = vmatprep.subr.mxu0 0.0
        %634 = vmatpush1.msra.mxu0 0.0
        %635 = vmatprep.subr.mxu0 0.0
        %636 = vmatpush1.msra.mxu0 0.0
        %637 = vmatprep.subr.mxu0 0.0
        %638 = vmatpush1.msra.mxu0 0.0
        %639 = vmatprep.subr.mxu0 0.0
        %640 = vmatpush1.msra.mxu0 0.0
        %641 = vmatprep.subr.mxu0 0.0
        %642 = vmatpush1.msra.mxu0 0.0
        %643 = vmatprep.subr.mxu0 0.0
        %644 = vmatpush1.msra.mxu0 0.0
        %645 = vmatprep.subr.mxu0 0.0
        %646 = vmatpush1.msra.mxu0 0.0
        %647 = vmatprep.subr.mxu0 0.0
        %648 = vmatpush1.msra.mxu0 0.0
        %649 = vmatprep.subr.mxu0 0.0
        %650 = vmatpush1.msra.mxu0 0.0
        %651 = vmatprep.mubr.f32.mxu0 0.0
        %v652 = vand.u32 %v344, 4294901760
        %v653 = vsub.f32 %v344, %v652
        %654 = vmatmul.mubr.f32.gmra.mrb[0].mxu0 %v653
        %v655 = vpop.f32.mrb[0].mxu0
        %v656 = vadd.f32 %v560, %v655
        %v657 = vpop.f32.mrb[0].mxu0
        %658 = vmatprep.mubr.f32.mxu0 0.0
        %v659 = vand.u32 %v347, 4294901760
        %v660 = vsub.f32 %v347, %v659
        %661 = vmatmul.mubr.f32.gmra.mrb[0].mxu0 %v660
        %v662 = vpop.f32.mrb[0].mxu0
        %v663 = vadd.f32 %v566, %v662
        %v664 = vpop.f32.mrb[0].mxu0
        %665 = vdwg.mxu0
        %666 = vmatprep.subr.mxu0 0.0
        %v667 = vand.u32 %v326, 4294901760
        %668 = vmatpush1.msra.mxu0 %v667
        %669 = vmatprep.subr.mxu0 0.0
        %v670 = vand.u32 %v327, 4294901760
        %671 = vmatpush1.msra.mxu0 %v670
        %672 = vmatprep.subr.mxu0 0.0
        %v673 = vand.u32 %v328, 4294901760
        %674 = vmatpush1.msra.mxu0 %v673
        %675 = vmatprep.subr.mxu0 0.0
        %v676 = vand.u32 %v329, 4294901760
        %677 = vmatpush1.msra.mxu0 %v676
        %678 = vmatprep.subr.mxu0 0.0
        %v679 = vand.u32 %v330, 4294901760
        %680 = vmatpush1.msra.mxu0 %v679
        %681 = vmatprep.subr.mxu0 0.0
        %v682 = vand.u32 %v331, 4294901760
        %683 = vmatpush1.msra.mxu0 %v682
        %684 = vmatprep.subr.mxu0 0.0
        %v685 = vand.u32 %v332, 4294901760
        %686 = vmatpush1.msra.mxu0 %v685
        %687 = vmatprep.subr.mxu0 0.0
        %v688 = vand.u32 %v333, 4294901760
        %689 = vmatpush1.msra.mxu0 %v688
        %690 = vmatprep.subr.mxu0 0.0
        %v691 = vand.u32 %v351, 4294901760
        %692 = vmatpush1.msra.mxu0 %v691
        %693 = vmatprep.subr.mxu0 0.0
        %694 = vmatpush1.msra.mxu0 0.0
        %695 = vmatprep.subr.mxu0 0.0
        %696 = vmatpush1.msra.mxu0 0.0
        %697 = vmatprep.subr.mxu0 0.0
        %698 = vmatpush1.msra.mxu0 0.0
        %699 = vmatprep.subr.mxu0 0.0
        %700 = vmatpush1.msra.mxu0 0.0
        %701 = vmatprep.subr.mxu0 0.0
        %702 = vmatpush1.msra.mxu0 0.0
        %703 = vmatprep.subr.mxu0 0.0
        %704 = vmatpush1.msra.mxu0 0.0
        %705 = vmatprep.subr.mxu0 0.0
        %706 = vmatpush1.msra.mxu0 0.0
        %707 = vmatprep.subr.mxu0 0.0
        %708 = vmatpush1.msra.mxu0 0.0
        %709 = vmatprep.subr.mxu0 0.0
        %710 = vmatpush1.msra.mxu0 0.0
        %711 = vmatprep.subr.mxu0 0.0
        %712 = vmatpush1.msra.mxu0 0.0
        %713 = vmatprep.subr.mxu0 0.0
        %714 = vmatpush1.msra.mxu0 0.0
        %715 = vmatprep.subr.mxu0 0.0
        %716 = vmatpush1.msra.mxu0 0.0
        %717 = vmatprep.subr.mxu0 0.0
        %718 = vmatpush1.msra.mxu0 0.0
        %719 = vmatprep.subr.mxu0 0.0
        %720 = vmatpush1.msra.mxu0 0.0
        %721 = vmatprep.subr.mxu0 0.0
        %722 = vmatpush1.msra.mxu0 0.0
        %723 = vmatprep.subr.mxu0 0.0
        %724 = vmatpush1.msra.mxu0 0.0
        %725 = vmatprep.subr.mxu0 0.0
        %726 = vmatpush1.msra.mxu0 0.0
        %727 = vmatprep.subr.mxu0 0.0
        %728 = vmatpush1.msra.mxu0 0.0
        %729 = vmatprep.subr.mxu0 0.0
        %730 = vmatpush1.msra.mxu0 0.0
        %731 = vmatprep.subr.mxu0 0.0
        %732 = vmatpush1.msra.mxu0 0.0
        %733 = vmatprep.subr.mxu0 0.0
        %734 = vmatpush1.msra.mxu0 0.0
        %735 = vmatprep.subr.mxu0 0.0
        %736 = vmatpush1.msra.mxu0 0.0
        %737 = vmatprep.subr.mxu0 0.0
        %738 = vmatpush1.msra.mxu0 0.0
        %739 = vmatprep.mubr.f32.mxu0 0.0
        %v740 = vand.u32 %v344, 4294901760
        %v741 = vsub.f32 %v344, %v740
        %v742 = vand.u32 %v741, 4294901760
        %743 = vmatmul.mubr.f32.gmra.mrb[0].mxu0 %v742
        %v744 = vpop.f32.mrb[0].mxu0
        %v745 = vadd.f32 %v656, %v744
        %v746 = vpop.f32.mrb[0].mxu0
        %747 = vmatprep.mubr.f32.mxu0 0.0
        %v748 = vand.u32 %v347, 4294901760
        %v749 = vsub.f32 %v347, %v748
        %v750 = vand.u32 %v749, 4294901760
        %751 = vmatmul.mubr.f32.gmra.mrb[0].mxu0 %v750
        %v752 = vpop.f32.mrb[0].mxu0
        %v753 = vadd.f32 %v663, %v752
        %v754 = vpop.f32.mrb[0].mxu0
        %755 = vdwg.mxu0
        %756 = vmatprep.subr.mxu0 0.0
        %v757 = vand.u32 %v326, 4294901760
        %v758 = vsub.f32 %v326, %v757
        %v759 = vand.u32 %v758, 4294901760
        %760 = vmatpush1.msra.mxu0 %v759
        %761 = vmatprep.subr.mxu0 0.0
        %v762 = vand.u32 %v327, 4294901760
        %v763 = vsub.f32 %v327, %v762
        %v764 = vand.u32 %v763, 4294901760
        %765 = vmatpush1.msra.mxu0 %v764
        %766 = vmatprep.subr.mxu0 0.0
        %v767 = vand.u32 %v328, 4294901760
        %v768 = vsub.f32 %v328, %v767
        %v769 = vand.u32 %v768, 4294901760
        %770 = vmatpush1.msra.mxu0 %v769
        %771 = vmatprep.subr.mxu0 0.0
        %v772 = vand.u32 %v329, 4294901760
        %v773 = vsub.f32 %v329, %v772
        %v774 = vand.u32 %v773, 4294901760
        %775 = vmatpush1.msra.mxu0 %v774
        %776 = vmatprep.subr.mxu0 0.0
        %v777 = vand.u32 %v330, 4294901760
        %v778 = vsub.f32 %v330, %v777
        %v779 = vand.u32 %v778, 4294901760
        %780 = vmatpush1.msra.mxu0 %v779
        %781 = vmatprep.subr.mxu0 0.0
        %v782 = vand.u32 %v331, 4294901760
        %v783 = vsub.f32 %v331, %v782
        %v784 = vand.u32 %v783, 4294901760
        %785 = vmatpush1.msra.mxu0 %v784
        %786 = vmatprep.subr.mxu0 0.0
        %v787 = vand.u32 %v332, 4294901760
        %v788 = vsub.f32 %v332, %v787
        %v789 = vand.u32 %v788, 4294901760
        %790 = vmatpush1.msra.mxu0 %v789
        %791 = vmatprep.subr.mxu0 0.0
        %v792 = vand.u32 %v333, 4294901760
        %v793 = vsub.f32 %v333, %v792
        %v794 = vand.u32 %v793, 4294901760
        %795 = vmatpush1.msra.mxu0 %v794
        %796 = vmatprep.subr.mxu0 0.0
        %v797 = vand.u32 %v351, 4294901760
        %v798 = vsub.f32 %v351, %v797
        %v799 = vand.u32 %v798, 4294901760
        %800 = vmatpush1.msra.mxu0 %v799
        %801 = vmatprep.subr.mxu0 0.0
        %802 = vmatpush1.msra.mxu0 0.0
        %803 = vmatprep.subr.mxu0 0.0
        %804 = vmatpush1.msra.mxu0 0.0
        %805 = vmatprep.subr.mxu0 0.0
        %806 = vmatpush1.msra.mxu0 0.0
        %807 = vmatprep.subr.mxu0 0.0
        %808 = vmatpush1.msra.mxu0 0.0
        %809 = vmatprep.subr.mxu0 0.0
        %810 = vmatpush1.msra.mxu0 0.0
        %811 = vmatprep.subr.mxu0 0.0
        %812 = vmatpush1.msra.mxu0 0.0
        %813 = vmatprep.subr.mxu0 0.0
        %814 = vmatpush1.msra.mxu0 0.0
        %815 = vmatprep.subr.mxu0 0.0
        %816 = vmatpush1.msra.mxu0 0.0
        %817 = vmatprep.subr.mxu0 0.0
        %818 = vmatpush1.msra.mxu0 0.0
        %819 = vmatprep.subr.mxu0 0.0
        %820 = vmatpush1.msra.mxu0 0.0
        %821 = vmatprep.subr.mxu0 0.0
        %822 = vmatpush1.msra.mxu0 0.0
        %823 = vmatprep.subr.mxu0 0.0
        %824 = vmatpush1.msra.mxu0 0.0
        %825 = vmatprep.subr.mxu0 0.0
        %826 = vmatpush1.msra.mxu0 0.0
        %827 = vmatprep.subr.mxu0 0.0
        %828 = vmatpush1.msra.mxu0 0.0
        %829 = vmatprep.subr.mxu0 0.0
        %830 = vmatpush1.msra.mxu0 0.0
        %831 = vmatprep.subr.mxu0 0.0
        %832 = vmatpush1.msra.mxu0 0.0
        %833 = vmatprep.subr.mxu0 0.0
        %834 = vmatpush1.msra.mxu0 0.0
        %835 = vmatprep.subr.mxu0 0.0
        %836 = vmatpush1.msra.mxu0 0.0
        %837 = vmatprep.subr.mxu0 0.0
        %838 = vmatpush1.msra.mxu0 0.0
        %839 = vmatprep.subr.mxu0 0.0
        %840 = vmatpush1.msra.mxu0 0.0
        %841 = vmatprep.subr.mxu0 0.0
        %842 = vmatpush1.msra.mxu0 0.0
        %843 = vmatprep.subr.mxu0 0.0
        %844 = vmatpush1.msra.mxu0 0.0
        %845 = vmatprep.subr.mxu0 0.0
        %846 = vmatpush1.msra.mxu0 0.0
        %847 = vmatprep.mubr.f32.mxu0 0.0
        %v848 = vand.u32 %v344, 4294901760
        %849 = vmatmul.mubr.f32.gmra.mrb[0].mxu0 %v848
        %v850 = vpop.f32.mrb[0].mxu0
        %v851 = vadd.f32 %v745, %v850
        %v852 = vpop.f32.mrb[0].mxu0
        %853 = vmatprep.mubr.f32.mxu0 0.0
        %v854 = vand.u32 %v347, 4294901760
        %855 = vmatmul.mubr.f32.gmra.mrb[0].mxu0 %v854
        %v856 = vpop.f32.mrb[0].mxu0
        %v857 = vadd.f32 %v753, %v856
        %v858 = vpop.f32.mrb[0].mxu0
        %859 = vdwg.mxu0
        %860 = vmatprep.subr.mxu0 0.0
        %v861 = vand.u32 %v326, 4294901760
        %862 = vmatpush1.msra.mxu0 %v861
        %863 = vmatprep.subr.mxu0 0.0
        %v864 = vand.u32 %v327, 4294901760
        %865 = vmatpush1.msra.mxu0 %v864
        %866 = vmatprep.subr.mxu0 0.0
        %v867 = vand.u32 %v328, 4294901760
        %868 = vmatpush1.msra.mxu0 %v867
        %869 = vmatprep.subr.mxu0 0.0
        %v870 = vand.u32 %v329, 4294901760
        %871 = vmatpush1.msra.mxu0 %v870
        %872 = vmatprep.subr.mxu0 0.0
        %v873 = vand.u32 %v330, 4294901760
        %874 = vmatpush1.msra.mxu0 %v873
        %875 = vmatprep.subr.mxu0 0.0
        %v876 = vand.u32 %v331, 4294901760
        %877 = vmatpush1.msra.mxu0 %v876
        %878 = vmatprep.subr.mxu0 0.0
        %v879 = vand.u32 %v332, 4294901760
        %880 = vmatpush1.msra.mxu0 %v879
        %881 = vmatprep.subr.mxu0 0.0
        %v882 = vand.u32 %v333, 4294901760
        %883 = vmatpush1.msra.mxu0 %v882
        %884 = vmatprep.subr.mxu0 0.0
        %v885 = vand.u32 %v351, 4294901760
        %886 = vmatpush1.msra.mxu0 %v885
        %887 = vmatprep.subr.mxu0 0.0
        %888 = vmatpush1.msra.mxu0 0.0
        %889 = vmatprep.subr.mxu0 0.0
        %890 = vmatpush1.msra.mxu0 0.0
        %891 = vmatprep.subr.mxu0 0.0
        %892 = vmatpush1.msra.mxu0 0.0
        %893 = vmatprep.subr.mxu0 0.0
        %894 = vmatpush1.msra.mxu0 0.0
        %895 = vmatprep.subr.mxu0 0.0
        %896 = vmatpush1.msra.mxu0 0.0
        %897 = vmatprep.subr.mxu0 0.0
        %898 = vmatpush1.msra.mxu0 0.0
        %899 = vmatprep.subr.mxu0 0.0
        %900 = vmatpush1.msra.mxu0 0.0
        %901 = vmatprep.subr.mxu0 0.0
        %902 = vmatpush1.msra.mxu0 0.0
        %903 = vmatprep.subr.mxu0 0.0
        %904 = vmatpush1.msra.mxu0 0.0
        %905 = vmatprep.subr.mxu0 0.0
        %906 = vmatpush1.msra.mxu0 0.0
        %907 = vmatprep.subr.mxu0 0.0
        %908 = vmatpush1.msra.mxu0 0.0
        %909 = vmatprep.subr.mxu0 0.0
        %910 = vmatpush1.msra.mxu0 0.0
        %911 = vmatprep.subr.mxu0 0.0
        %912 = vmatpush1.msra.mxu0 0.0
        %913 = vmatprep.subr.mxu0 0.0
        %914 = vmatpush1.msra.mxu0 0.0
        %915 = vmatprep.subr.mxu0 0.0
        %916 = vmatpush1.msra.mxu0 0.0
        %917 = vmatprep.subr.mxu0 0.0
        %918 = vmatpush1.msra.mxu0 0.0
        %919 = vmatprep.subr.mxu0 0.0
        %920 = vmatpush1.msra.mxu0 0.0
        %921 = vmatprep.subr.mxu0 0.0
        %922 = vmatpush1.msra.mxu0 0.0
        %923 = vmatprep.subr.mxu0 0.0
        %924 = vmatpush1.msra.mxu0 0.0
        %925 = vmatprep.subr.mxu0 0.0
        %926 = vmatpush1.msra.mxu0 0.0
        %927 = vmatprep.subr.mxu0 0.0
        %928 = vmatpush1.msra.mxu0 0.0
        %929 = vmatprep.subr.mxu0 0.0
        %930 = vmatpush1.msra.mxu0 0.0
        %931 = vmatprep.subr.mxu0 0.0
        %932 = vmatpush1.msra.mxu0 0.0
        %933 = vmatprep.mubr.f32.mxu0 0.0
        %v934 = vand.u32 %v344, 4294901760
        %935 = vmatmul.mubr.f32.gmra.mrb[0].mxu0 %v934
        %v936 = vpop.f32.mrb[0].mxu0
        %v937 = vadd.f32 %v851, %v936
        %v938 = vpop.f32.mrb[0].mxu0
        %939 = vmatprep.mubr.f32.mxu0 0.0
        %v940 = vand.u32 %v347, 4294901760
        %941 = vmatmul.mubr.f32.gmra.mrb[0].mxu0 %v940
        %v942 = vpop.f32.mrb[0].mxu0
        %v943 = vadd.f32 %v857, %v942
        %v944 = vpop.f32.mrb[0].mxu0
        %945 = vdwg.mxu0
        %v946 = vand.u32 2147483647, %v937
        %v947 = vand.u32 2147483647, %v943
        %v948 = vsub.f32 0.0, %v946
        %v949 = vsub.f32 0.0, %v947
        %v950 = vmul.f32 %v948, 1.442695
        %v951 = vpow.pop %v950
        %v952 = vmul.f32 %v949, 1.442695
        %v953 = vpow.pop %v952
        %vm954 = vcmp.ge.f32.partialorder %v937, 0.0
        %vm955 = vcmp.ge.f32.partialorder %v943, 0.0
        %v956 = vmul.f32 %v951, 2.0
        %v957 = vmul.f32 %v953, 2.0
        %v958 = vadd.f32 %v956, 1.0
        %v959 = vadd.f32 %v957, 1.0
        %v960 = vadd.f32 %v951, 2.0
        %v961 = vadd.f32 %v953, 2.0
        %v962 = vmul.f32 %v960, %v951
        %v963 = vmul.f32 %v961, %v953
        %v964 = vsel %vm954, %v958, %v962
        %v965 = vsel %vm955, %v959, %v963
        %v966 = vmul.f32 %v951, %v951
        %v967 = vmul.f32 %v953, %v953
        %v968 = vmul.f32 %v966, 2.0
        %v969 = vmul.f32 %v967, 2.0
        %v970 = vsel %vm954, %v968, 2.0
        %v971 = vsel %vm955, %v969, 2.0
        %v972 = vadd.f32 %v964, %v970
        %v973 = vadd.f32 %v965, %v971
        %v974 = vrcp.pop %v972
        %v975 = vrcp.pop %v973
        %v976 = vmul.f32 %v972, %v974
        %v977 = vmul.f32 %v973, %v975
        %v978 = vsub.f32 2.0, %v976
        %v979 = vsub.f32 2.0, %v977
        %v980 = vmul.f32 %v974, %v978
        %v981 = vmul.f32 %v975, %v979
        %v982 = vmul.f32 %v964, %v980
        %v983 = vmul.f32 %v965, %v981
        %v984 = vmul.f32 %v937, %v982
        %v985 = vmul.f32 %v943, %v983
        %v986 = vld [vmem:[%s3] sm:$0xff]
        %v987 = vld [vmem:[%s3 + $0x8] sm:$0xff]
        %v988 = vld [vmem:[%s3 + $0x10] sm:$0xff]
        %v989 = vld [vmem:[%s3 + $0x18] sm:$0xff]
        %v990 = vld [vmem:[%s3 + $0x20] sm:$0xff]
        %v991 = vld [vmem:[%s3 + $0x28] sm:$0xff]
        %v992 = vld [vmem:[%s3 + $0x30] sm:$0xff]
        %v993 = vld [vmem:[%s3 + $0x38] sm:$0xff]
        %v994 = vld [vmem:[%s3 + $0x40] sm:$0xff]
        %v995 = vld [vmem:[%s3 + $0x48] sm:$0xff]
        %v996 = vld [vmem:[%s3 + $0x50] sm:$0xff]
        %v997 = vld [vmem:[%s3 + $0x58] sm:$0xff]
        %v998 = vld [vmem:[%s3 + $0x60] sm:$0xff]
        %v999 = vld [vmem:[%s3 + $0x68] sm:$0xff]
        %v1000 = vld [vmem:[%s3 + $0x70] sm:$0xff]
        %v1001 = vld [vmem:[%s3 + $0x78] sm:$0xff]
        %v1002 = vld [vmem:[%s4] sm:$0x1]
        %v1004 = vlaneseq
        %v1005 = vshrl.u32 %v1004, 7
        %v1006 = vsub.s32 0, %v1005
        %v1007 = vrot.slane %v1002, %v1006
        %1009 = vmatprep.subr.mxu0 0.0
        %v1010 = vand.u32 %v986, 4294901760
        %1011 = vmatpush1.msra.mxu0 %v1010
        %1012 = vmatprep.subr.mxu0 0.0
        %v1013 = vand.u32 %v987, 4294901760
        %1014 = vmatpush1.msra.mxu0 %v1013
        %1015 = vmatprep.subr.mxu0 0.0
        %v1016 = vand.u32 %v988, 4294901760
        %1017 = vmatpush1.msra.mxu0 %v1016
        %1018 = vmatprep.subr.mxu0 0.0
        %v1019 = vand.u32 %v989, 4294901760
        %1020 = vmatpush1.msra.mxu0 %v1019
        %1021 = vmatprep.subr.mxu0 0.0
        %v1022 = vand.u32 %v990, 4294901760
        %1023 = vmatpush1.msra.mxu0 %v1022
        %1024 = vmatprep.subr.mxu0 0.0
        %v1025 = vand.u32 %v991, 4294901760
        %1026 = vmatpush1.msra.mxu0 %v1025
        %1027 = vmatprep.subr.mxu0 0.0
        %v1028 = vand.u32 %v992, 4294901760
        %1029 = vmatpush1.msra.mxu0 %v1028
        %1030 = vmatprep.subr.mxu0 0.0
        %v1031 = vand.u32 %v993, 4294901760
        %1032 = vmatpush1.msra.mxu0 %v1031
        %1033 = vmatprep.subr.mxu0 0.0
        %v1034 = vand.u32 %v994, 4294901760
        %1035 = vmatpush1.msra.mxu0 %v1034
        %1036 = vmatprep.subr.mxu0 0.0
        %v1037 = vand.u32 %v995, 4294901760
        %1038 = vmatpush1.msra.mxu0 %v1037
        %1039 = vmatprep.subr.mxu0 0.0
        %v1040 = vand.u32 %v996, 4294901760
        %1041 = vmatpush1.msra.mxu0 %v1040
        %1042 = vmatprep.subr.mxu0 0.0
        %v1043 = vand.u32 %v997, 4294901760
        %1044 = vmatpush1.msra.mxu0 %v1043
        %1045 = vmatprep.subr.mxu0 0.0
        %v1046 = vand.u32 %v998, 4294901760
        %1047 = vmatpush1.msra.mxu0 %v1046
        %1048 = vmatprep.subr.mxu0 0.0
        %v1049 = vand.u32 %v999, 4294901760
        %1050 = vmatpush1.msra.mxu0 %v1049
        %1051 = vmatprep.subr.mxu0 0.0
        %v1052 = vand.u32 %v1000, 4294901760
        %1053 = vmatpush1.msra.mxu0 %v1052
        %1054 = vmatprep.subr.mxu0 0.0
        %v1055 = vand.u32 %v1001, 4294901760
        %1056 = vmatpush1.msra.mxu0 %v1055
        %1057 = vmatprep.subr.mxu0 0.0
        %1058 = vmatpush1.msra.mxu0 0.0
        %1059 = vmatprep.subr.mxu0 0.0
        %1060 = vmatpush1.msra.mxu0 0.0
        %1061 = vmatprep.subr.mxu0 0.0
        %1062 = vmatpush1.msra.mxu0 0.0
        %1063 = vmatprep.subr.mxu0 0.0
        %1064 = vmatpush1.msra.mxu0 0.0
        %1065 = vmatprep.subr.mxu0 0.0
        %1066 = vmatpush1.msra.mxu0 0.0
        %1067 = vmatprep.subr.mxu0 0.0
        %1068 = vmatpush1.msra.mxu0 0.0
        %1069 = vmatprep.subr.mxu0 0.0
        %1070 = vmatpush1.msra.mxu0 0.0
        %1071 = vmatprep.subr.mxu0 0.0
        %1072 = vmatpush1.msra.mxu0 0.0
        %1073 = vmatprep.subr.mxu0 0.0
        %1074 = vmatpush1.msra.mxu0 0.0
        %1075 = vmatprep.subr.mxu0 0.0
        %1076 = vmatpush1.msra.mxu0 0.0
        %1077 = vmatprep.subr.mxu0 0.0
        %1078 = vmatpush1.msra.mxu0 0.0
        %1079 = vmatprep.subr.mxu0 0.0
        %1080 = vmatpush1.msra.mxu0 0.0
        %1081 = vmatprep.subr.mxu0 0.0
        %1082 = vmatpush1.msra.mxu0 0.0
        %1083 = vmatprep.subr.mxu0 0.0
        %1084 = vmatpush1.msra.mxu0 0.0
        %1085 = vmatprep.subr.mxu0 0.0
        %1086 = vmatpush1.msra.mxu0 0.0
        %1087 = vmatprep.subr.mxu0 0.0
        %1088 = vmatpush1.msra.mxu0 0.0
        %1089 = vmatprep.mubr.f32.mxu0 0.0
        %v1090 = vand.u32 %v984, 4294901760
        %v1091 = vsub.f32 %v984, %v1090
        %v1092 = vand.u32 %v1091, 4294901760
        %v1093 = vsub.f32 %v1091, %v1092
        %v1094 = vand.u32 %v1093, 4294901760
        %1095 = vmatmul.mubr.f32.gmra.mrb[0].mxu0 %v1094
        %v1096 = vpop.f32.mrb[0].mxu0
        %v1097 = vadd.f32 %v1007, %v1096
        %v1098 = vpop.f32.mrb[0].mxu0
        %1099 = vmatprep.mubr.f32.mxu0 0.0
        %v1100 = vand.u32 %v985, 4294901760
        %v1101 = vsub.f32 %v985, %v1100
        %v1102 = vand.u32 %v1101, 4294901760
        %v1103 = vsub.f32 %v1101, %v1102
        %v1104 = vand.u32 %v1103, 4294901760
        %1105 = vmatmul.mubr.f32.gmra.mrb[0].mxu0 %v1104
        %v1106 = vpop.f32.mrb[0].mxu0
        %v1107 = vadd.f32 %v1007, %v1106
        %v1108 = vpop.f32.mrb[0].mxu0
        %1109 = vdwg.mxu0
        %1110 = vmatprep.subr.mxu0 0.0
        %v1111 = vand.u32 %v986, 4294901760
        %v1112 = vsub.f32 %v986, %v1111
        %v1113 = vand.u32 %v1112, 4294901760
        %v1114 = vsub.f32 %v1112, %v1113
        %v1115 = vand.u32 %v1114, 4294901760
        %1116 = vmatpush1.msra.mxu0 %v1115
        %1117 = vmatprep.subr.mxu0 0.0
        %v1118 = vand.u32 %v987, 4294901760
        %v1119 = vsub.f32 %v987, %v1118
        %v1120 = vand.u32 %v1119, 4294901760
        %v1121 = vsub.f32 %v1119, %v1120
        %v1122 = vand.u32 %v1121, 4294901760
        %1123 = vmatpush1.msra.mxu0 %v1122
        %1124 = vmatprep.subr.mxu0 0.0
        %v1125 = vand.u32 %v988, 4294901760
        %v1126 = vsub.f32 %v988, %v1125
        %v1127 = vand.u32 %v1126, 4294901760
        %v1128 = vsub.f32 %v1126, %v1127
        %v1129 = vand.u32 %v1128, 4294901760
        %1130 = vmatpush1.msra.mxu0 %v1129
        %1131 = vmatprep.subr.mxu0 0.0
        %v1132 = vand.u32 %v989, 4294901760
        %v1133 = vsub.f32 %v989, %v1132
        %v1134 = vand.u32 %v1133, 4294901760
        %v1135 = vsub.f32 %v1133, %v1134
        %v1136 = vand.u32 %v1135, 4294901760
        %1137 = vmatpush1.msra.mxu0 %v1136
        %1138 = vmatprep.subr.mxu0 0.0
        %v1139 = vand.u32 %v990, 4294901760
        %v1140 = vsub.f32 %v990, %v1139
        %v1141 = vand.u32 %v1140, 4294901760
        %v1142 = vsub.f32 %v1140, %v1141
        %v1143 = vand.u32 %v1142, 4294901760
        %1144 = vmatpush1.msra.mxu0 %v1143
        %1145 = vmatprep.subr.mxu0 0.0
        %v1146 = vand.u32 %v991, 4294901760
        %v1147 = vsub.f32 %v991, %v1146
        %v1148 = vand.u32 %v1147, 4294901760
        %v1149 = vsub.f32 %v1147, %v1148
        %v1150 = vand.u32 %v1149, 4294901760
        %1151 = vmatpush1.msra.mxu0 %v1150
        %1152 = vmatprep.subr.mxu0 0.0
        %v1153 = vand.u32 %v992, 4294901760
        %v1154 = vsub.f32 %v992, %v1153
        %v1155 = vand.u32 %v1154, 4294901760
        %v1156 = vsub.f32 %v1154, %v1155
        %v1157 = vand.u32 %v1156, 4294901760
        %1158 = vmatpush1.msra.mxu0 %v1157
        %1159 = vmatprep.subr.mxu0 0.0
        %v1160 = vand.u32 %v993, 4294901760
        %v1161 = vsub.f32 %v993, %v1160
        %v1162 = vand.u32 %v1161, 4294901760
        %v1163 = vsub.f32 %v1161, %v1162
        %v1164 = vand.u32 %v1163, 4294901760
        %1165 = vmatpush1.msra.mxu0 %v1164
        %1166 = vmatprep.subr.mxu0 0.0
        %v1167 = vand.u32 %v994, 4294901760
        %v1168 = vsub.f32 %v994, %v1167
        %v1169 = vand.u32 %v1168, 4294901760
        %v1170 = vsub.f32 %v1168, %v1169
        %v1171 = vand.u32 %v1170, 4294901760
        %1172 = vmatpush1.msra.mxu0 %v1171
        %1173 = vmatprep.subr.mxu0 0.0
        %v1174 = vand.u32 %v995, 4294901760
        %v1175 = vsub.f32 %v995, %v1174
        %v1176 = vand.u32 %v1175, 4294901760
        %v1177 = vsub.f32 %v1175, %v1176
        %v1178 = vand.u32 %v1177, 4294901760
        %1179 = vmatpush1.msra.mxu0 %v1178
        %1180 = vmatprep.subr.mxu0 0.0
        %v1181 = vand.u32 %v996, 4294901760
        %v1182 = vsub.f32 %v996, %v1181
        %v1183 = vand.u32 %v1182, 4294901760
        %v1184 = vsub.f32 %v1182, %v1183
        %v1185 = vand.u32 %v1184, 4294901760
        %1186 = vmatpush1.msra.mxu0 %v1185
        %1187 = vmatprep.subr.mxu0 0.0
        %v1188 = vand.u32 %v997, 4294901760
        %v1189 = vsub.f32 %v997, %v1188
        %v1190 = vand.u32 %v1189, 4294901760
        %v1191 = vsub.f32 %v1189, %v1190
        %v1192 = vand.u32 %v1191, 4294901760
        %1193 = vmatpush1.msra.mxu0 %v1192
        %1194 = vmatprep.subr.mxu0 0.0
        %v1195 = vand.u32 %v998, 4294901760
        %v1196 = vsub.f32 %v998, %v1195
        %v1197 = vand.u32 %v1196, 4294901760
        %v1198 = vsub.f32 %v1196, %v1197
        %v1199 = vand.u32 %v1198, 4294901760
        %1200 = vmatpush1.msra.mxu0 %v1199
        %1201 = vmatprep.subr.mxu0 0.0
        %v1202 = vand.u32 %v999, 4294901760
        %v1203 = vsub.f32 %v999, %v1202
        %v1204 = vand.u32 %v1203, 4294901760
        %v1205 = vsub.f32 %v1203, %v1204
        %v1206 = vand.u32 %v1205, 4294901760
        %1207 = vmatpush1.msra.mxu0 %v1206
        %1208 = vmatprep.subr.mxu0 0.0
        %v1209 = vand.u32 %v1000, 4294901760
        %v1210 = vsub.f32 %v1000, %v1209
        %v1211 = vand.u32 %v1210, 4294901760
        %v1212 = vsub.f32 %v1210, %v1211
        %v1213 = vand.u32 %v1212, 4294901760
        %1214 = vmatpush1.msra.mxu0 %v1213
        %1215 = vmatprep.subr.mxu0 0.0
        %v1216 = vand.u32 %v1001, 4294901760
        %v1217 = vsub.f32 %v1001, %v1216
        %v1218 = vand.u32 %v1217, 4294901760
        %v1219 = vsub.f32 %v1217, %v1218
        %v1220 = vand.u32 %v1219, 4294901760
        %1221 = vmatpush1.msra.mxu0 %v1220
        %1222 = vmatprep.subr.mxu0 0.0
        %1223 = vmatpush1.msra.mxu0 0.0
        %1224 = vmatprep.subr.mxu0 0.0
        %1225 = vmatpush1.msra.mxu0 0.0
        %1226 = vmatprep.subr.mxu0 0.0
        %1227 = vmatpush1.msra.mxu0 0.0
        %1228 = vmatprep.subr.mxu0 0.0
        %1229 = vmatpush1.msra.mxu0 0.0
        %1230 = vmatprep.subr.mxu0 0.0
        %1231 = vmatpush1.msra.mxu0 0.0
        %1232 = vmatprep.subr.mxu0 0.0
        %1233 = vmatpush1.msra.mxu0 0.0
        %1234 = vmatprep.subr.mxu0 0.0
        %1235 = vmatpush1.msra.mxu0 0.0
        %1236 = vmatprep.subr.mxu0 0.0
        %1237 = vmatpush1.msra.mxu0 0.0
        %1238 = vmatprep.subr.mxu0 0.0
        %1239 = vmatpush1.msra.mxu0 0.0
        %1240 = vmatprep.subr.mxu0 0.0
        %1241 = vmatpush1.msra.mxu0 0.0
        %1242 = vmatprep.subr.mxu0 0.0
        %1243 = vmatpush1.msra.mxu0 0.0
        %1244 = vmatprep.subr.mxu0 0.0
        %1245 = vmatpush1.msra.mxu0 0.0
        %1246 = vmatprep.subr.mxu0 0.0
        %1247 = vmatpush1.msra.mxu0 0.0
        %1248 = vmatprep.subr.mxu0 0.0
        %1249 = vmatpush1.msra.mxu0 0.0
        %1250 = vmatprep.subr.mxu0 0.0
        %1251 = vmatpush1.msra.mxu0 0.0
        %1252 = vmatprep.subr.mxu0 0.0
        %1253 = vmatpush1.msra.mxu0 0.0
        %1254 = vmatprep.mubr.f32.mxu0 0.0
        %v1255 = vand.u32 %v984, 4294901760
        %1256 = vmatmul.mubr.f32.gmra.mrb[0].mxu0 %v1255
        %v1257 = vpop.f32.mrb[0].mxu0
        %v1258 = vadd.f32 %v1097, %v1257
        %v1259 = vpop.f32.mrb[0].mxu0
        %1260 = vmatprep.mubr.f32.mxu0 0.0
        %v1261 = vand.u32 %v985, 4294901760
        %1262 = vmatmul.mubr.f32.gmra.mrb[0].mxu0 %v1261
        %v1263 = vpop.f32.mrb[0].mxu0
        %v1264 = vadd.f32 %v1107, %v1263
        %v1265 = vpop.f32.mrb[0].mxu0
        %1266 = vdwg.mxu0
        %1267 = vmatprep.subr.mxu0 0.0
        %v1268 = vand.u32 %v986, 4294901760
        %v1269 = vsub.f32 %v986, %v1268
        %1270 = vmatpush1.msra.mxu0 %v1269
        %1271 = vmatprep.subr.mxu0 0.0
        %v1272 = vand.u32 %v987, 4294901760
        %v1273 = vsub.f32 %v987, %v1272
        %1274 = vmatpush1.msra.mxu0 %v1273
        %1275 = vmatprep.subr.mxu0 0.0
        %v1276 = vand.u32 %v988, 4294901760
        %v1277 = vsub.f32 %v988, %v1276
        %1278 = vmatpush1.msra.mxu0 %v1277
        %1279 = vmatprep.subr.mxu0 0.0
        %v1280 = vand.u32 %v989, 4294901760
        %v1281 = vsub.f32 %v989, %v1280
        %1282 = vmatpush1.msra.mxu0 %v1281
        %1283 = vmatprep.subr.mxu0 0.0
        %v1284 = vand.u32 %v990, 4294901760
        %v1285 = vsub.f32 %v990, %v1284
        %1286 = vmatpush1.msra.mxu0 %v1285
        %1287 = vmatprep.subr.mxu0 0.0
        %v1288 = vand.u32 %v991, 4294901760
        %v1289 = vsub.f32 %v991, %v1288
        %1290 = vmatpush1.msra.mxu0 %v1289
        %1291 = vmatprep.subr.mxu0 0.0
        %v1292 = vand.u32 %v992, 4294901760
        %v1293 = vsub.f32 %v992, %v1292
        %1294 = vmatpush1.msra.mxu0 %v1293
        %1295 = vmatprep.subr.mxu0 0.0
        %v1296 = vand.u32 %v993, 4294901760
        %v1297 = vsub.f32 %v993, %v1296
        %1298 = vmatpush1.msra.mxu0 %v1297
        %1299 = vmatprep.subr.mxu0 0.0
        %v1300 = vand.u32 %v994, 4294901760
        %v1301 = vsub.f32 %v994, %v1300
        %1302 = vmatpush1.msra.mxu0 %v1301
        %1303 = vmatprep.subr.mxu0 0.0
        %v1304 = vand.u32 %v995, 4294901760
        %v1305 = vsub.f32 %v995, %v1304
        %1306 = vmatpush1.msra.mxu0 %v1305
        %1307 = vmatprep.subr.mxu0 0.0
        %v1308 = vand.u32 %v996, 4294901760
        %v1309 = vsub.f32 %v996, %v1308
        %1310 = vmatpush1.msra.mxu0 %v1309
        %1311 = vmatprep.subr.mxu0 0.0
        %v1312 = vand.u32 %v997, 4294901760
        %v1313 = vsub.f32 %v997, %v1312
        %1314 = vmatpush1.msra.mxu0 %v1313
        %1315 = vmatprep.subr.mxu0 0.0
        %v1316 = vand.u32 %v998, 4294901760
        %v1317 = vsub.f32 %v998, %v1316
        %1318 = vmatpush1.msra.mxu0 %v1317
        %1319 = vmatprep.subr.mxu0 0.0
        %v1320 = vand.u32 %v999, 4294901760
        %v1321 = vsub.f32 %v999, %v1320
        %1322 = vmatpush1.msra.mxu0 %v1321
        %1323 = vmatprep.subr.mxu0 0.0
        %v1324 = vand.u32 %v1000, 4294901760
        %v1325 = vsub.f32 %v1000, %v1324
        %1326 = vmatpush1.msra.mxu0 %v1325
        %1327 = vmatprep.subr.mxu0 0.0
        %v1328 = vand.u32 %v1001, 4294901760
        %v1329 = vsub.f32 %v1001, %v1328
        %1330 = vmatpush1.msra.mxu0 %v1329
        %1331 = vmatprep.subr.mxu0 0.0
        %1332 = vmatpush1.msra.mxu0 0.0
        %1333 = vmatprep.subr.mxu0 0.0
        %1334 = vmatpush1.msra.mxu0 0.0
        %1335 = vmatprep.subr.mxu0 0.0
        %1336 = vmatpush1.msra.mxu0 0.0
        %1337 = vmatprep.subr.mxu0 0.0
        %1338 = vmatpush1.msra.mxu0 0.0
        %1339 = vmatprep.subr.mxu0 0.0
        %1340 = vmatpush1.msra.mxu0 0.0
        %1341 = vmatprep.subr.mxu0 0.0
        %1342 = vmatpush1.msra.mxu0 0.0
        %1343 = vmatprep.subr.mxu0 0.0
        %1344 = vmatpush1.msra.mxu0 0.0
        %1345 = vmatprep.subr.mxu0 0.0
        %1346 = vmatpush1.msra.mxu0 0.0
        %1347 = vmatprep.subr.mxu0 0.0
        %1348 = vmatpush1.msra.mxu0 0.0
        %1349 = vmatprep.subr.mxu0 0.0
        %1350 = vmatpush1.msra.mxu0 0.0
        %1351 = vmatprep.subr.mxu0 0.0
        %1352 = vmatpush1.msra.mxu0 0.0
        %1353 = vmatprep.subr.mxu0 0.0
        %1354 = vmatpush1.msra.mxu0 0.0
        %1355 = vmatprep.subr.mxu0 0.0
        %1356 = vmatpush1.msra.mxu0 0.0
        %1357 = vmatprep.subr.mxu0 0.0
        %1358 = vmatpush1.msra.mxu0 0.0
        %1359 = vmatprep.subr.mxu0 0.0
        %1360 = vmatpush1.msra.mxu0 0.0
        %1361 = vmatprep.subr.mxu0 0.0
        %1362 = vmatpush1.msra.mxu0 0.0
        %1363 = vmatprep.mubr.f32.mxu0 0.0
        %v1364 = vand.u32 %v984, 4294901760
        %v1365 = vsub.f32 %v984, %v1364
        %1366 = vmatmul.mubr.f32.gmra.mrb[0].mxu0 %v1365
        %v1367 = vpop.f32.mrb[0].mxu0
        %v1368 = vadd.f32 %v1258, %v1367
        %v1369 = vpop.f32.mrb[0].mxu0
        %1370 = vmatprep.mubr.f32.mxu0 0.0
        %v1371 = vand.u32 %v985, 4294901760
        %v1372 = vsub.f32 %v985, %v1371
        %1373 = vmatmul.mubr.f32.gmra.mrb[0].mxu0 %v1372
        %v1374 = vpop.f32.mrb[0].mxu0
        %v1375 = vadd.f32 %v1264, %v1374
        %v1376 = vpop.f32.mrb[0].mxu0
        %1377 = vdwg.mxu0
        %1378 = vmatprep.subr.mxu0 0.0
        %v1379 = vand.u32 %v986, 4294901760
        %1380 = vmatpush1.msra.mxu0 %v1379
        %1381 = vmatprep.subr.mxu0 0.0
        %v1382 = vand.u32 %v987, 4294901760
        %1383 = vmatpush1.msra.mxu0 %v1382
        %1384 = vmatprep.subr.mxu0 0.0
        %v1385 = vand.u32 %v988, 4294901760
        %1386 = vmatpush1.msra.mxu0 %v1385
        %1387 = vmatprep.subr.mxu0 0.0
        %v1388 = vand.u32 %v989, 4294901760
        %1389 = vmatpush1.msra.mxu0 %v1388
        %1390 = vmatprep.subr.mxu0 0.0
        %v1391 = vand.u32 %v990, 4294901760
        %1392 = vmatpush1.msra.mxu0 %v1391
        %1393 = vmatprep.subr.mxu0 0.0
        %v1394 = vand.u32 %v991, 4294901760
        %1395 = vmatpush1.msra.mxu0 %v1394
        %1396 = vmatprep.subr.mxu0 0.0
        %v1397 = vand.u32 %v992, 4294901760
        %1398 = vmatpush1.msra.mxu0 %v1397
        %1399 = vmatprep.subr.mxu0 0.0
        %v1400 = vand.u32 %v993, 4294901760
        %1401 = vmatpush1.msra.mxu0 %v1400
        %1402 = vmatprep.subr.mxu0 0.0
        %v1403 = vand.u32 %v994, 4294901760
        %1404 = vmatpush1.msra.mxu0 %v1403
        %1405 = vmatprep.subr.mxu0 0.0
        %v1406 = vand.u32 %v995, 4294901760
        %1407 = vmatpush1.msra.mxu0 %v1406
        %1408 = vmatprep.subr.mxu0 0.0
        %v1409 = vand.u32 %v996, 4294901760
        %1410 = vmatpush1.msra.mxu0 %v1409
        %1411 = vmatprep.subr.mxu0 0.0
        %v1412 = vand.u32 %v997, 4294901760
        %1413 = vmatpush1.msra.mxu0 %v1412
        %1414 = vmatprep.subr.mxu0 0.0
        %v1415 = vand.u32 %v998, 4294901760
        %1416 = vmatpush1.msra.mxu0 %v1415
        %1417 = vmatprep.subr.mxu0 0.0
        %v1418 = vand.u32 %v999, 4294901760
        %1419 = vmatpush1.msra.mxu0 %v1418
        %1420 = vmatprep.subr.mxu0 0.0
        %v1421 = vand.u32 %v1000, 4294901760
        %1422 = vmatpush1.msra.mxu0 %v1421
        %1423 = vmatprep.subr.mxu0 0.0
        %v1424 = vand.u32 %v1001, 4294901760
        %1425 = vmatpush1.msra.mxu0 %v1424
        %1426 = vmatprep.subr.mxu0 0.0
        %1427 = vmatpush1.msra.mxu0 0.0
        %1428 = vmatprep.subr.mxu0 0.0
        %1429 = vmatpush1.msra.mxu0 0.0
        %1430 = vmatprep.subr.mxu0 0.0
        %1431 = vmatpush1.msra.mxu0 0.0
        %1432 = vmatprep.subr.mxu0 0.0
        %1433 = vmatpush1.msra.mxu0 0.0
        %1434 = vmatprep.subr.mxu0 0.0
        %1435 = vmatpush1.msra.mxu0 0.0
        %1436 = vmatprep.subr.mxu0 0.0
        %1437 = vmatpush1.msra.mxu0 0.0
        %1438 = vmatprep.subr.mxu0 0.0
        %1439 = vmatpush1.msra.mxu0 0.0
        %1440 = vmatprep.subr.mxu0 0.0
        %1441 = vmatpush1.msra.mxu0 0.0
        %1442 = vmatprep.subr.mxu0 0.0
        %1443 = vmatpush1.msra.mxu0 0.0
        %1444 = vmatprep.subr.mxu0 0.0
        %1445 = vmatpush1.msra.mxu0 0.0
        %1446 = vmatprep.subr.mxu0 0.0
        %1447 = vmatpush1.msra.mxu0 0.0
        %1448 = vmatprep.subr.mxu0 0.0
        %1449 = vmatpush1.msra.mxu0 0.0
        %1450 = vmatprep.subr.mxu0 0.0
        %1451 = vmatpush1.msra.mxu0 0.0
        %1452 = vmatprep.subr.mxu0 0.0
        %1453 = vmatpush1.msra.mxu0 0.0
        %1454 = vmatprep.subr.mxu0 0.0
        %1455 = vmatpush1.msra.mxu0 0.0
        %1456 = vmatprep.subr.mxu0 0.0
        %1457 = vmatpush1.msra.mxu0 0.0
        %1458 = vmatprep.mubr.f32.mxu0 0.0
        %v1459 = vand.u32 %v984, 4294901760
        %v1460 = vsub.f32 %v984, %v1459
        %v1461 = vand.u32 %v1460, 4294901760
        %1462 = vmatmul.mubr.f32.gmra.mrb[0].mxu0 %v1461
        %v1463 = vpop.f32.mrb[0].mxu0
        %v1464 = vadd.f32 %v1368, %v1463
        %v1465 = vpop.f32.mrb[0].mxu0
        %1466 = vmatprep.mubr.f32.mxu0 0.0
        %v1467 = vand.u32 %v985, 4294901760
        %v1468 = vsub.f32 %v985, %v1467
        %v1469 = vand.u32 %v1468, 4294901760
        %1470 = vmatmul.mubr.f32.gmra.mrb[0].mxu0 %v1469
        %v1471 = vpop.f32.mrb[0].mxu0
        %v1472 = vadd.f32 %v1375, %v1471
        %v1473 = vpop.f32.mrb[0].mxu0
        %1474 = vdwg.mxu0
        %1475 = vmatprep.subr.mxu0 0.0
        %v1476 = vand.u32 %v986, 4294901760
        %v1477 = vsub.f32 %v986, %v1476
        %v1478 = vand.u32 %v1477, 4294901760
        %1479 = vmatpush1.msra.mxu0 %v1478
        %1480 = vmatprep.subr.mxu0 0.0
        %v1481 = vand.u32 %v987, 4294901760
        %v1482 = vsub.f32 %v987, %v1481
        %v1483 = vand.u32 %v1482, 4294901760
        %1484 = vmatpush1.msra.mxu0 %v1483
        %1485 = vmatprep.subr.mxu0 0.0
        %v1486 = vand.u32 %v988, 4294901760
        %v1487 = vsub.f32 %v988, %v1486
        %v1488 = vand.u32 %v1487, 4294901760
        %1489 = vmatpush1.msra.mxu0 %v1488
        %1490 = vmatprep.subr.mxu0 0.0
        %v1491 = vand.u32 %v989, 4294901760
        %v1492 = vsub.f32 %v989, %v1491
        %v1493 = vand.u32 %v1492, 4294901760
        %1494 = vmatpush1.msra.mxu0 %v1493
        %1495 = vmatprep.subr.mxu0 0.0
        %v1496 = vand.u32 %v990, 4294901760
        %v1497 = vsub.f32 %v990, %v1496
        %v1498 = vand.u32 %v1497, 4294901760
        %1499 = vmatpush1.msra.mxu0 %v1498
        %1500 = vmatprep.subr.mxu0 0.0
        %v1501 = vand.u32 %v991, 4294901760
        %v1502 = vsub.f32 %v991, %v1501
        %v1503 = vand.u32 %v1502, 4294901760
        %1504 = vmatpush1.msra.mxu0 %v1503
        %1505 = vmatprep.subr.mxu0 0.0
        %v1506 = vand.u32 %v992, 4294901760
        %v1507 = vsub.f32 %v992, %v1506
        %v1508 = vand.u32 %v1507, 4294901760
        %1509 = vmatpush1.msra.mxu0 %v1508
        %1510 = vmatprep.subr.mxu0 0.0
        %v1511 = vand.u32 %v993, 4294901760
        %v1512 = vsub.f32 %v993, %v1511
        %v1513 = vand.u32 %v1512, 4294901760
        %1514 = vmatpush1.msra.mxu0 %v1513
        %1515 = vmatprep.subr.mxu0 0.0
        %v1516 = vand.u32 %v994, 4294901760
        %v1517 = vsub.f32 %v994, %v1516
        %v1518 = vand.u32 %v1517, 4294901760
        %1519 = vmatpush1.msra.mxu0 %v1518
        %1520 = vmatprep.subr.mxu0 0.0
        %v1521 = vand.u32 %v995, 4294901760
        %v1522 = vsub.f32 %v995, %v1521
        %v1523 = vand.u32 %v1522, 4294901760
        %1524 = vmatpush1.msra.mxu0 %v1523
        %1525 = vmatprep.subr.mxu0 0.0
        %v1526 = vand.u32 %v996, 4294901760
        %v1527 = vsub.f32 %v996, %v1526
        %v1528 = vand.u32 %v1527, 4294901760
        %1529 = vmatpush1.msra.mxu0 %v1528
        %1530 = vmatprep.subr.mxu0 0.0
        %v1531 = vand.u32 %v997, 4294901760
        %v1532 = vsub.f32 %v997, %v1531
        %v1533 = vand.u32 %v1532, 4294901760
        %1534 = vmatpush1.msra.mxu0 %v1533
        %1535 = vmatprep.subr.mxu0 0.0
        %v1536 = vand.u32 %v998, 4294901760
        %v1537 = vsub.f32 %v998, %v1536
        %v1538 = vand.u32 %v1537, 4294901760
        %1539 = vmatpush1.msra.mxu0 %v1538
        %1540 = vmatprep.subr.mxu0 0.0
        %v1541 = vand.u32 %v999, 4294901760
        %v1542 = vsub.f32 %v999, %v1541
        %v1543 = vand.u32 %v1542, 4294901760
        %1544 = vmatpush1.msra.mxu0 %v1543
        %1545 = vmatprep.subr.mxu0 0.0
        %v1546 = vand.u32 %v1000, 4294901760
        %v1547 = vsub.f32 %v1000, %v1546
        %v1548 = vand.u32 %v1547, 4294901760
        %1549 = vmatpush1.msra.mxu0 %v1548
        %1550 = vmatprep.subr.mxu0 0.0
        %v1551 = vand.u32 %v1001, 4294901760
        %v1552 = vsub.f32 %v1001, %v1551
        %v1553 = vand.u32 %v1552, 4294901760
        %1554 = vmatpush1.msra.mxu0 %v1553
        %1555 = vmatprep.subr.mxu0 0.0
        %1556 = vmatpush1.msra.mxu0 0.0
        %1557 = vmatprep.subr.mxu0 0.0
        %1558 = vmatpush1.msra.mxu0 0.0
        %1559 = vmatprep.subr.mxu0 0.0
        %1560 = vmatpush1.msra.mxu0 0.0
        %1561 = vmatprep.subr.mxu0 0.0
        %1562 = vmatpush1.msra.mxu0 0.0
        %1563 = vmatprep.subr.mxu0 0.0
        %1564 = vmatpush1.msra.mxu0 0.0
        %1565 = vmatprep.subr.mxu0 0.0
        %1566 = vmatpush1.msra.mxu0 0.0
        %1567 = vmatprep.subr.mxu0 0.0
        %1568 = vmatpush1.msra.mxu0 0.0
        %1569 = vmatprep.subr.mxu0 0.0
        %1570 = vmatpush1.msra.mxu0 0.0
        %1571 = vmatprep.subr.mxu0 0.0
        %1572 = vmatpush1.msra.mxu0 0.0
        %1573 = vmatprep.subr.mxu0 0.0
        %1574 = vmatpush1.msra.mxu0 0.0
        %1575 = vmatprep.subr.mxu0 0.0
        %1576 = vmatpush1.msra.mxu0 0.0
        %1577 = vmatprep.subr.mxu0 0.0
        %1578 = vmatpush1.msra.mxu0 0.0
        %1579 = vmatprep.subr.mxu0 0.0
        %1580 = vmatpush1.msra.mxu0 0.0
        %1581 = vmatprep.subr.mxu0 0.0
        %1582 = vmatpush1.msra.mxu0 0.0
        %1583 = vmatprep.subr.mxu0 0.0
        %1584 = vmatpush1.msra.mxu0 0.0
        %1585 = vmatprep.subr.mxu0 0.0
        %1586 = vmatpush1.msra.mxu0 0.0
        %1587 = vmatprep.mubr.f32.mxu0 0.0
        %v1588 = vand.u32 %v984, 4294901760
        %1589 = vmatmul.mubr.f32.gmra.mrb[0].mxu0 %v1588
        %v1590 = vpop.f32.mrb[0].mxu0
        %v1591 = vadd.f32 %v1464, %v1590
        %v1592 = vpop.f32.mrb[0].mxu0
        %1593 = vmatprep.mubr.f32.mxu0 0.0
        %v1594 = vand.u32 %v985, 4294901760
        %1595 = vmatmul.mubr.f32.gmra.mrb[0].mxu0 %v1594
        %v1596 = vpop.f32.mrb[0].mxu0
        %v1597 = vadd.f32 %v1472, %v1596
        %v1598 = vpop.f32.mrb[0].mxu0
        %1599 = vdwg.mxu0
        %1600 = vmatprep.subr.mxu0 0.0
        %v1601 = vand.u32 %v986, 4294901760
        %1602 = vmatpush1.msra.mxu0 %v1601
        %1603 = vmatprep.subr.mxu0 0.0
        %v1604 = vand.u32 %v987, 4294901760
        %1605 = vmatpush1.msra.mxu0 %v1604
        %1606 = vmatprep.subr.mxu0 0.0
        %v1607 = vand.u32 %v988, 4294901760
        %1608 = vmatpush1.msra.mxu0 %v1607
        %1609 = vmatprep.subr.mxu0 0.0
        %v1610 = vand.u32 %v989, 4294901760
        %1611 = vmatpush1.msra.mxu0 %v1610
        %1612 = vmatprep.subr.mxu0 0.0
        %v1613 = vand.u32 %v990, 4294901760
        %1614 = vmatpush1.msra.mxu0 %v1613
        %1615 = vmatprep.subr.mxu0 0.0
        %v1616 = vand.u32 %v991, 4294901760
        %1617 = vmatpush1.msra.mxu0 %v1616
        %1618 = vmatprep.subr.mxu0 0.0
        %v1619 = vand.u32 %v992, 4294901760
        %1620 = vmatpush1.msra.mxu0 %v1619
        %1621 = vmatprep.subr.mxu0 0.0
        %v1622 = vand.u32 %v993, 4294901760
        %1623 = vmatpush1.msra.mxu0 %v1622
        %1624 = vmatprep.subr.mxu0 0.0
        %v1625 = vand.u32 %v994, 4294901760
        %1626 = vmatpush1.msra.mxu0 %v1625
        %1627 = vmatprep.subr.mxu0 0.0
        %v1628 = vand.u32 %v995, 4294901760
        %1629 = vmatpush1.msra.mxu0 %v1628
        %1630 = vmatprep.subr.mxu0 0.0
        %v1631 = vand.u32 %v996, 4294901760
        %1632 = vmatpush1.msra.mxu0 %v1631
        %1633 = vmatprep.subr.mxu0 0.0
        %v1634 = vand.u32 %v997, 4294901760
        %1635 = vmatpush1.msra.mxu0 %v1634
        %1636 = vmatprep.subr.mxu0 0.0
        %v1637 = vand.u32 %v998, 4294901760
        %1638 = vmatpush1.msra.mxu0 %v1637
        %1639 = vmatprep.subr.mxu0 0.0
        %v1640 = vand.u32 %v999, 4294901760
        %1641 = vmatpush1.msra.mxu0 %v1640
        %1642 = vmatprep.subr.mxu0 0.0
        %v1643 = vand.u32 %v1000, 4294901760
        %1644 = vmatpush1.msra.mxu0 %v1643
        %1645 = vmatprep.subr.mxu0 0.0
        %v1646 = vand.u32 %v1001, 4294901760
        %1647 = vmatpush1.msra.mxu0 %v1646
        %1648 = vmatprep.subr.mxu0 0.0
        %1649 = vmatpush1.msra.mxu0 0.0
        %1650 = vmatprep.subr.mxu0 0.0
        %1651 = vmatpush1.msra.mxu0 0.0
        %1652 = vmatprep.subr.mxu0 0.0
        %1653 = vmatpush1.msra.mxu0 0.0
        %1654 = vmatprep.subr.mxu0 0.0
        %1655 = vmatpush1.msra.mxu0 0.0
        %1656 = vmatprep.subr.mxu0 0.0
        %1657 = vmatpush1.msra.mxu0 0.0
        %1658 = vmatprep.subr.mxu0 0.0
        %1659 = vmatpush1.msra.mxu0 0.0
        %1660 = vmatprep.subr.mxu0 0.0
        %1661 = vmatpush1.msra.mxu0 0.0
        %1662 = vmatprep.subr.mxu0 0.0
        %1663 = vmatpush1.msra.mxu0 0.0
        %1664 = vmatprep.subr.mxu0 0.0
        %1665 = vmatpush1.msra.mxu0 0.0
        %1666 = vmatprep.subr.mxu0 0.0
        %1667 = vmatpush1.msra.mxu0 0.0
        %1668 = vmatprep.subr.mxu0 0.0
        %1669 = vmatpush1.msra.mxu0 0.0
        %1670 = vmatprep.subr.mxu0 0.0
        %1671 = vmatpush1.msra.mxu0 0.0
        %1672 = vmatprep.subr.mxu0 0.0
        %1673 = vmatpush1.msra.mxu0 0.0
        %1674 = vmatprep.subr.mxu0 0.0
        %1675 = vmatpush1.msra.mxu0 0.0
        %1676 = vmatprep.subr.mxu0 0.0
        %1677 = vmatpush1.msra.mxu0 0.0
        %1678 = vmatprep.subr.mxu0 0.0
        %1679 = vmatpush1.msra.mxu0 0.0
        %1680 = vmatprep.mubr.f32.mxu0 0.0
        %v1681 = vand.u32 %v984, 4294901760
        %1682 = vmatmul.mubr.f32.gmra.mrb[0].mxu0 %v1681
        %v1683 = vpop.f32.mrb[0].mxu0
        %v1684 = vadd.f32 %v1591, %v1683
        %v1685 = vpop.f32.mrb[0].mxu0
        %1686 = vmatprep.mubr.f32.mxu0 0.0
        %v1687 = vand.u32 %v985, 4294901760
        %1688 = vmatmul.mubr.f32.gmra.mrb[0].mxu0 %v1687
        %v1689 = vpop.f32.mrb[0].mxu0
        %v1690 = vadd.f32 %v1597, %v1689
        %v1691 = vpop.f32.mrb[0].mxu0
        %1692 = vdwg.mxu0
        %v1693 = vand.u32 2147483647, %v1684
        %v1694 = vand.u32 2147483647, %v1690
        %v1695 = vsub.f32 0.0, %v1693
        %v1696 = vsub.f32 0.0, %v1694
        %v1697 = vmul.f32 %v1695, 1.442695
        %v1698 = vpow.pop %v1697
        %v1699 = vmul.f32 %v1696, 1.442695
        %v1700 = vpow.pop %v1699
        %vm1701 = vcmp.ge.f32.partialorder %v1684, 0.0
        %vm1702 = vcmp.ge.f32.partialorder %v1690, 0.0
        %v1703 = vmul.f32 %v1698, 2.0
        %v1704 = vmul.f32 %v1700, 2.0
        %v1705 = vadd.f32 %v1703, 1.0
        %v1706 = vadd.f32 %v1704, 1.0
        %v1707 = vadd.f32 %v1698, 2.0
        %v1708 = vadd.f32 %v1700, 2.0
        %v1709 = vmul.f32 %v1707, %v1698
        %v1710 = vmul.f32 %v1708, %v1700
        %v1711 = vsel %vm1701, %v1705, %v1709
        %v1712 = vsel %vm1702, %v1706, %v1710
        %v1713 = vmul.f32 %v1698, %v1698
        %v1714 = vmul.f32 %v1700, %v1700
        %v1715 = vmul.f32 %v1713, 2.0
        %v1716 = vmul.f32 %v1714, 2.0
        %v1717 = vsel %vm1701, %v1715, 2.0
        %v1718 = vsel %vm1702, %v1716, 2.0
        %v1719 = vadd.f32 %v1711, %v1717
        %v1720 = vadd.f32 %v1712, %v1718
        %v1721 = vrcp.pop %v1719
        %v1722 = vrcp.pop %v1720
        %v1723 = vmul.f32 %v1719, %v1721
        %v1724 = vmul.f32 %v1720, %v1722
        %v1725 = vsub.f32 2.0, %v1723
        %v1726 = vsub.f32 2.0, %v1724
        %v1727 = vmul.f32 %v1721, %v1725
        %v1728 = vmul.f32 %v1722, %v1726
        %v1729 = vmul.f32 %v1711, %v1727
        %v1730 = vmul.f32 %v1712, %v1728
        %v1731 = vmul.f32 %v1684, %v1729
        %v1732 = vmul.f32 %v1690, %v1730
        %v1733 = vld [vmem:[%s5] sm:$0xff]
        %v1734 = vld [vmem:[%s5 + $0x8] sm:$0xff]
        %v1735 = vld [vmem:[%s5 + $0x10] sm:$0xff]
        %v1736 = vld [vmem:[%s5 + $0x18] sm:$0xff]
        %v1737 = vld [vmem:[%s5 + $0x20] sm:$0xff]
        %v1738 = vld [vmem:[%s5 + $0x28] sm:$0xff]
        %v1739 = vld [vmem:[%s5 + $0x30] sm:$0xff]
        %v1740 = vld [vmem:[%s5 + $0x38] sm:$0xff]
        %v1741 = vld [vmem:[%s5 + $0x40] sm:$0xff]
        %v1742 = vld [vmem:[%s5 + $0x48] sm:$0xff]
        %v1743 = vld [vmem:[%s5 + $0x50] sm:$0xff]
        %v1744 = vld [vmem:[%s5 + $0x58] sm:$0xff]
        %v1745 = vld [vmem:[%s5 + $0x60] sm:$0xff]
        %v1746 = vld [vmem:[%s5 + $0x68] sm:$0xff]
        %v1747 = vld [vmem:[%s5 + $0x70] sm:$0xff]
        %v1748 = vld [vmem:[%s5 + $0x78] sm:$0xff]
        %v1749 = vld [vmem:[%s6] sm:$0x1]
        %v1751 = vlaneseq
        %v1752 = vshrl.u32 %v1751, 7
        %v1753 = vsub.s32 0, %v1752
        %v1754 = vrot.slane %v1749, %v1753
        %1756 = vmatprep.subr.mxu0 0.0
        %v1757 = vand.u32 %v1733, 4294901760
        %1758 = vmatpush1.msra.mxu0 %v1757
        %1759 = vmatprep.subr.mxu0 0.0
        %v1760 = vand.u32 %v1734, 4294901760
        %1761 = vmatpush1.msra.mxu0 %v1760
        %1762 = vmatprep.subr.mxu0 0.0
        %v1763 = vand.u32 %v1735, 4294901760
        %1764 = vmatpush1.msra.mxu0 %v1763
        %1765 = vmatprep.subr.mxu0 0.0
        %v1766 = vand.u32 %v1736, 4294901760
        %1767 = vmatpush1.msra.mxu0 %v1766
        %1768 = vmatprep.subr.mxu0 0.0
        %v1769 = vand.u32 %v1737, 4294901760
        %1770 = vmatpush1.msra.mxu0 %v1769
        %1771 = vmatprep.subr.mxu0 0.0
        %v1772 = vand.u32 %v1738, 4294901760
        %1773 = vmatpush1.msra.mxu0 %v1772
        %1774 = vmatprep.subr.mxu0 0.0
        %v1775 = vand.u32 %v1739, 4294901760
        %1776 = vmatpush1.msra.mxu0 %v1775
        %1777 = vmatprep.subr.mxu0 0.0
        %v1778 = vand.u32 %v1740, 4294901760
        %1779 = vmatpush1.msra.mxu0 %v1778
        %1780 = vmatprep.subr.mxu0 0.0
        %v1781 = vand.u32 %v1741, 4294901760
        %1782 = vmatpush1.msra.mxu0 %v1781
        %1783 = vmatprep.subr.mxu0 0.0
        %v1784 = vand.u32 %v1742, 4294901760
        %1785 = vmatpush1.msra.mxu0 %v1784
        %1786 = vmatprep.subr.mxu0 0.0
        %v1787 = vand.u32 %v1743, 4294901760
        %1788 = vmatpush1.msra.mxu0 %v1787
        %1789 = vmatprep.subr.mxu0 0.0
        %v1790 = vand.u32 %v1744, 4294901760
        %1791 = vmatpush1.msra.mxu0 %v1790
        %1792 = vmatprep.subr.mxu0 0.0
        %v1793 = vand.u32 %v1745, 4294901760
        %1794 = vmatpush1.msra.mxu0 %v1793
        %1795 = vmatprep.subr.mxu0 0.0
        %v1796 = vand.u32 %v1746, 4294901760
        %1797 = vmatpush1.msra.mxu0 %v1796
        %1798 = vmatprep.subr.mxu0 0.0
        %v1799 = vand.u32 %v1747, 4294901760
        %1800 = vmatpush1.msra.mxu0 %v1799
        %1801 = vmatprep.subr.mxu0 0.0
        %v1802 = vand.u32 %v1748, 4294901760
        %1803 = vmatpush1.msra.mxu0 %v1802
        %1804 = vmatprep.subr.mxu0 0.0
        %1805 = vmatpush1.msra.mxu0 0.0
        %1806 = vmatprep.subr.mxu0 0.0
        %1807 = vmatpush1.msra.mxu0 0.0
        %1808 = vmatprep.subr.mxu0 0.0
        %1809 = vmatpush1.msra.mxu0 0.0
        %1810 = vmatprep.subr.mxu0 0.0
        %1811 = vmatpush1.msra.mxu0 0.0
        %1812 = vmatprep.subr.mxu0 0.0
        %1813 = vmatpush1.msra.mxu0 0.0
        %1814 = vmatprep.subr.mxu0 0.0
        %1815 = vmatpush1.msra.mxu0 0.0
        %1816 = vmatprep.subr.mxu0 0.0
        %1817 = vmatpush1.msra.mxu0 0.0
        %1818 = vmatprep.subr.mxu0 0.0
        %1819 = vmatpush1.msra.mxu0 0.0
        %1820 = vmatprep.subr.mxu0 0.0
        %1821 = vmatpush1.msra.mxu0 0.0
        %1822 = vmatprep.subr.mxu0 0.0
        %1823 = vmatpush1.msra.mxu0 0.0
        %1824 = vmatprep.subr.mxu0 0.0
        %1825 = vmatpush1.msra.mxu0 0.0
        %1826 = vmatprep.subr.mxu0 0.0
        %1827 = vmatpush1.msra.mxu0 0.0
        %1828 = vmatprep.subr.mxu0 0.0
        %1829 = vmatpush1.msra.mxu0 0.0
        %1830 = vmatprep.subr.mxu0 0.0
        %1831 = vmatpush1.msra.mxu0 0.0
        %1832 = vmatprep.subr.mxu0 0.0
        %1833 = vmatpush1.msra.mxu0 0.0
        %1834 = vmatprep.subr.mxu0 0.0
        %1835 = vmatpush1.msra.mxu0 0.0
        %1836 = vmatprep.mubr.f32.mxu0 0.0
        %v1837 = vand.u32 %v1731, 4294901760
        %v1838 = vsub.f32 %v1731, %v1837
        %v1839 = vand.u32 %v1838, 4294901760
        %v1840 = vsub.f32 %v1838, %v1839
        %v1841 = vand.u32 %v1840, 4294901760
        %1842 = vmatmul.mubr.f32.gmra.mrb[0].mxu0 %v1841
        %v1843 = vpop.f32.mrb[0].mxu0
        %v1844 = vadd.f32 %v1754, %v1843
        %v1845 = vpop.f32.mrb[0].mxu0
        %1846 = vmatprep.mubr.f32.mxu0 0.0
        %v1847 = vand.u32 %v1732, 4294901760
        %v1848 = vsub.f32 %v1732, %v1847
        %v1849 = vand.u32 %v1848, 4294901760
        %v1850 = vsub.f32 %v1848, %v1849
        %v1851 = vand.u32 %v1850, 4294901760
        %1852 = vmatmul.mubr.f32.gmra.mrb[0].mxu0 %v1851
        %v1853 = vpop.f32.mrb[0].mxu0
        %v1854 = vadd.f32 %v1754, %v1853
        %v1855 = vpop.f32.mrb[0].mxu0
        %1856 = vdwg.mxu0
        %1857 = vmatprep.subr.mxu0 0.0
        %v1858 = vand.u32 %v1733, 4294901760
        %v1859 = vsub.f32 %v1733, %v1858
        %v1860 = vand.u32 %v1859, 4294901760
        %v1861 = vsub.f32 %v1859, %v1860
        %v1862 = vand.u32 %v1861, 4294901760
        %1863 = vmatpush1.msra.mxu0 %v1862
        %1864 = vmatprep.subr.mxu0 0.0
        %v1865 = vand.u32 %v1734, 4294901760
        %v1866 = vsub.f32 %v1734, %v1865
        %v1867 = vand.u32 %v1866, 4294901760
        %v1868 = vsub.f32 %v1866, %v1867
        %v1869 = vand.u32 %v1868, 4294901760
        %1870 = vmatpush1.msra.mxu0 %v1869
        %1871 = vmatprep.subr.mxu0 0.0
        %v1872 = vand.u32 %v1735, 4294901760
        %v1873 = vsub.f32 %v1735, %v1872
        %v1874 = vand.u32 %v1873, 4294901760
        %v1875 = vsub.f32 %v1873, %v1874
        %v1876 = vand.u32 %v1875, 4294901760
        %1877 = vmatpush1.msra.mxu0 %v1876
        %1878 = vmatprep.subr.mxu0 0.0
        %v1879 = vand.u32 %v1736, 4294901760
        %v1880 = vsub.f32 %v1736, %v1879
        %v1881 = vand.u32 %v1880, 4294901760
        %v1882 = vsub.f32 %v1880, %v1881
        %v1883 = vand.u32 %v1882, 4294901760
        %1884 = vmatpush1.msra.mxu0 %v1883
        %1885 = vmatprep.subr.mxu0 0.0
        %v1886 = vand.u32 %v1737, 4294901760
        %v1887 = vsub.f32 %v1737, %v1886
        %v1888 = vand.u32 %v1887, 4294901760
        %v1889 = vsub.f32 %v1887, %v1888
        %v1890 = vand.u32 %v1889, 4294901760
        %1891 = vmatpush1.msra.mxu0 %v1890
        %1892 = vmatprep.subr.mxu0 0.0
        %v1893 = vand.u32 %v1738, 4294901760
        %v1894 = vsub.f32 %v1738, %v1893
        %v1895 = vand.u32 %v1894, 4294901760
        %v1896 = vsub.f32 %v1894, %v1895
        %v1897 = vand.u32 %v1896, 4294901760
        %1898 = vmatpush1.msra.mxu0 %v1897
        %1899 = vmatprep.subr.mxu0 0.0
        %v1900 = vand.u32 %v1739, 4294901760
        %v1901 = vsub.f32 %v1739, %v1900
        %v1902 = vand.u32 %v1901, 4294901760
        %v1903 = vsub.f32 %v1901, %v1902
        %v1904 = vand.u32 %v1903, 4294901760
        %1905 = vmatpush1.msra.mxu0 %v1904
        %1906 = vmatprep.subr.mxu0 0.0
        %v1907 = vand.u32 %v1740, 4294901760
        %v1908 = vsub.f32 %v1740, %v1907
        %v1909 = vand.u32 %v1908, 4294901760
        %v1910 = vsub.f32 %v1908, %v1909
        %v1911 = vand.u32 %v1910, 4294901760
        %1912 = vmatpush1.msra.mxu0 %v1911
        %1913 = vmatprep.subr.mxu0 0.0
        %v1914 = vand.u32 %v1741, 4294901760
        %v1915 = vsub.f32 %v1741, %v1914
        %v1916 = vand.u32 %v1915, 4294901760
        %v1917 = vsub.f32 %v1915, %v1916
        %v1918 = vand.u32 %v1917, 4294901760
        %1919 = vmatpush1.msra.mxu0 %v1918
        %1920 = vmatprep.subr.mxu0 0.0
        %v1921 = vand.u32 %v1742, 4294901760
        %v1922 = vsub.f32 %v1742, %v1921
        %v1923 = vand.u32 %v1922, 4294901760
        %v1924 = vsub.f32 %v1922, %v1923
        %v1925 = vand.u32 %v1924, 4294901760
        %1926 = vmatpush1.msra.mxu0 %v1925
        %1927 = vmatprep.subr.mxu0 0.0
        %v1928 = vand.u32 %v1743, 4294901760
        %v1929 = vsub.f32 %v1743, %v1928
        %v1930 = vand.u32 %v1929, 4294901760
        %v1931 = vsub.f32 %v1929, %v1930
        %v1932 = vand.u32 %v1931, 4294901760
        %1933 = vmatpush1.msra.mxu0 %v1932
        %1934 = vmatprep.subr.mxu0 0.0
        %v1935 = vand.u32 %v1744, 4294901760
        %v1936 = vsub.f32 %v1744, %v1935
        %v1937 = vand.u32 %v1936, 4294901760
        %v1938 = vsub.f32 %v1936, %v1937
        %v1939 = vand.u32 %v1938, 4294901760
        %1940 = vmatpush1.msra.mxu0 %v1939
        %1941 = vmatprep.subr.mxu0 0.0
        %v1942 = vand.u32 %v1745, 4294901760
        %v1943 = vsub.f32 %v1745, %v1942
        %v1944 = vand.u32 %v1943, 4294901760
        %v1945 = vsub.f32 %v1943, %v1944
        %v1946 = vand.u32 %v1945, 4294901760
        %1947 = vmatpush1.msra.mxu0 %v1946
        %1948 = vmatprep.subr.mxu0 0.0
        %v1949 = vand.u32 %v1746, 4294901760
        %v1950 = vsub.f32 %v1746, %v1949
        %v1951 = vand.u32 %v1950, 4294901760
        %v1952 = vsub.f32 %v1950, %v1951
        %v1953 = vand.u32 %v1952, 4294901760
        %1954 = vmatpush1.msra.mxu0 %v1953
        %1955 = vmatprep.subr.mxu0 0.0
        %v1956 = vand.u32 %v1747, 4294901760
        %v1957 = vsub.f32 %v1747, %v1956
        %v1958 = vand.u32 %v1957, 4294901760
        %v1959 = vsub.f32 %v1957, %v1958
        %v1960 = vand.u32 %v1959, 4294901760
        %1961 = vmatpush1.msra.mxu0 %v1960
        %1962 = vmatprep.subr.mxu0 0.0
        %v1963 = vand.u32 %v1748, 4294901760
        %v1964 = vsub.f32 %v1748, %v1963
        %v1965 = vand.u32 %v1964, 4294901760
        %v1966 = vsub.f32 %v1964, %v1965
        %v1967 = vand.u32 %v1966, 4294901760
        %1968 = vmatpush1.msra.mxu0 %v1967
        %1969 = vmatprep.subr.mxu0 0.0
        %1970 = vmatpush1.msra.mxu0 0.0
        %1971 = vmatprep.subr.mxu0 0.0
        %1972 = vmatpush1.msra.mxu0 0.0
        %1973 = vmatprep.subr.mxu0 0.0
        %1974 = vmatpush1.msra.mxu0 0.0
        %1975 = vmatprep.subr.mxu0 0.0
        %1976 = vmatpush1.msra.mxu0 0.0
        %1977 = vmatprep.subr.mxu0 0.0
        %1978 = vmatpush1.msra.mxu0 0.0
        %1979 = vmatprep.subr.mxu0 0.0
        %1980 = vmatpush1.msra.mxu0 0.0
        %1981 = vmatprep.subr.mxu0 0.0
        %1982 = vmatpush1.msra.mxu0 0.0
        %1983 = vmatprep.subr.mxu0 0.0
        %1984 = vmatpush1.msra.mxu0 0.0
        %1985 = vmatprep.subr.mxu0 0.0
        %1986 = vmatpush1.msra.mxu0 0.0
        %1987 = vmatprep.subr.mxu0 0.0
        %1988 = vmatpush1.msra.mxu0 0.0
        %1989 = vmatprep.subr.mxu0 0.0
        %1990 = vmatpush1.msra.mxu0 0.0
        %1991 = vmatprep.subr.mxu0 0.0
        %1992 = vmatpush1.msra.mxu0 0.0
        %1993 = vmatprep.subr.mxu0 0.0
        %1994 = vmatpush1.msra.mxu0 0.0
        %1995 = vmatprep.subr.mxu0 0.0
        %1996 = vmatpush1.msra.mxu0 0.0
        %1997 = vmatprep.subr.mxu0 0.0
        %1998 = vmatpush1.msra.mxu0 0.0
        %1999 = vmatprep.subr.mxu0 0.0
        %2000 = vmatpush1.msra.mxu0 0.0
        %2001 = vmatprep.mubr.f32.mxu0 0.0
        %v2002 = vand.u32 %v1731, 4294901760
        %2003 = vmatmul.mubr.f32.gmra.mrb[0].mxu0 %v2002
        %v2004 = vpop.f32.mrb[0].mxu0
        %v2005 = vadd.f32 %v1844, %v2004
        %v2006 = vpop.f32.mrb[0].mxu0
        %2007 = vmatprep.mubr.f32.mxu0 0.0
        %v2008 = vand.u32 %v1732, 4294901760
        %2009 = vmatmul.mubr.f32.gmra.mrb[0].mxu0 %v2008
        %v2010 = vpop.f32.mrb[0].mxu0
        %v2011 = vadd.f32 %v1854, %v2010
        %v2012 = vpop.f32.mrb[0].mxu0
        %2013 = vdwg.mxu0
        %2014 = vmatprep.subr.mxu0 0.0
        %v2015 = vand.u32 %v1733, 4294901760
        %v2016 = vsub.f32 %v1733, %v2015
        %2017 = vmatpush1.msra.mxu0 %v2016
        %2018 = vmatprep.subr.mxu0 0.0
        %v2019 = vand.u32 %v1734, 4294901760
        %v2020 = vsub.f32 %v1734, %v2019
        %2021 = vmatpush1.msra.mxu0 %v2020
        %2022 = vmatprep.subr.mxu0 0.0
        %v2023 = vand.u32 %v1735, 4294901760
        %v2024 = vsub.f32 %v1735, %v2023
        %2025 = vmatpush1.msra.mxu0 %v2024
        %2026 = vmatprep.subr.mxu0 0.0
        %v2027 = vand.u32 %v1736, 4294901760
        %v2028 = vsub.f32 %v1736, %v2027
        %2029 = vmatpush1.msra.mxu0 %v2028
        %2030 = vmatprep.subr.mxu0 0.0
        %v2031 = vand.u32 %v1737, 4294901760
        %v2032 = vsub.f32 %v1737, %v2031
        %2033 = vmatpush1.msra.mxu0 %v2032
        %2034 = vmatprep.subr.mxu0 0.0
        %v2035 = vand.u32 %v1738, 4294901760
        %v2036 = vsub.f32 %v1738, %v2035
        %2037 = vmatpush1.msra.mxu0 %v2036
        %2038 = vmatprep.subr.mxu0 0.0
        %v2039 = vand.u32 %v1739, 4294901760
        %v2040 = vsub.f32 %v1739, %v2039
        %2041 = vmatpush1.msra.mxu0 %v2040
        %2042 = vmatprep.subr.mxu0 0.0
        %v2043 = vand.u32 %v1740, 4294901760
        %v2044 = vsub.f32 %v1740, %v2043
        %2045 = vmatpush1.msra.mxu0 %v2044
        %2046 = vmatprep.subr.mxu0 0.0
        %v2047 = vand.u32 %v1741, 4294901760
        %v2048 = vsub.f32 %v1741, %v2047
        %2049 = vmatpush1.msra.mxu0 %v2048
        %2050 = vmatprep.subr.mxu0 0.0
        %v2051 = vand.u32 %v1742, 4294901760
        %v2052 = vsub.f32 %v1742, %v2051
        %2053 = vmatpush1.msra.mxu0 %v2052
        %2054 = vmatprep.subr.mxu0 0.0
        %v2055 = vand.u32 %v1743, 4294901760
        %v2056 = vsub.f32 %v1743, %v2055
        %2057 = vmatpush1.msra.mxu0 %v2056
        %2058 = vmatprep.subr.mxu0 0.0
        %v2059 = vand.u32 %v1744, 4294901760
        %v2060 = vsub.f32 %v1744, %v2059
        %2061 = vmatpush1.msra.mxu0 %v2060
        %2062 = vmatprep.subr.mxu0 0.0
        %v2063 = vand.u32 %v1745, 4294901760
        %v2064 = vsub.f32 %v1745, %v2063
        %2065 = vmatpush1.msra.mxu0 %v2064
        %2066 = vmatprep.subr.mxu0 0.0
        %v2067 = vand.u32 %v1746, 4294901760
        %v2068 = vsub.f32 %v1746, %v2067
        %2069 = vmatpush1.msra.mxu0 %v2068
        %2070 = vmatprep.subr.mxu0 0.0
        %v2071 = vand.u32 %v1747, 4294901760
        %v2072 = vsub.f32 %v1747, %v2071
        %2073 = vmatpush1.msra.mxu0 %v2072
        %2074 = vmatprep.subr.mxu0 0.0
        %v2075 = vand.u32 %v1748, 4294901760
        %v2076 = vsub.f32 %v1748, %v2075
        %2077 = vmatpush1.msra.mxu0 %v2076
        %2078 = vmatprep.subr.mxu0 0.0
        %2079 = vmatpush1.msra.mxu0 0.0
        %2080 = vmatprep.subr.mxu0 0.0
        %2081 = vmatpush1.msra.mxu0 0.0
        %2082 = vmatprep.subr.mxu0 0.0
        %2083 = vmatpush1.msra.mxu0 0.0
        %2084 = vmatprep.subr.mxu0 0.0
        %2085 = vmatpush1.msra.mxu0 0.0
        %2086 = vmatprep.subr.mxu0 0.0
        %2087 = vmatpush1.msra.mxu0 0.0
        %2088 = vmatprep.subr.mxu0 0.0
        %2089 = vmatpush1.msra.mxu0 0.0
        %2090 = vmatprep.subr.mxu0 0.0
        %2091 = vmatpush1.msra.mxu0 0.0
        %2092 = vmatprep.subr.mxu0 0.0
        %2093 = vmatpush1.msra.mxu0 0.0
        %2094 = vmatprep.subr.mxu0 0.0
        %2095 = vmatpush1.msra.mxu0 0.0
        %2096 = vmatprep.subr.mxu0 0.0
        %2097 = vmatpush1.msra.mxu0 0.0
        %2098 = vmatprep.subr.mxu0 0.0
        %2099 = vmatpush1.msra.mxu0 0.0
        %2100 = vmatprep.subr.mxu0 0.0
        %2101 = vmatpush1.msra.mxu0 0.0
        %2102 = vmatprep.subr.mxu0 0.0
        %2103 = vmatpush1.msra.mxu0 0.0
        %2104 = vmatprep.subr.mxu0 0.0
        %2105 = vmatpush1.msra.mxu0 0.0
        %2106 = vmatprep.subr.mxu0 0.0
        %2107 = vmatpush1.msra.mxu0 0.0
        %2108 = vmatprep.subr.mxu0 0.0
        %2109 = vmatpush1.msra.mxu0 0.0
        %2110 = vmatprep.mubr.f32.mxu0 0.0
        %v2111 = vand.u32 %v1731, 4294901760
        %v2112 = vsub.f32 %v1731, %v2111
        %2113 = vmatmul.mubr.f32.gmra.mrb[0].mxu0 %v2112
        %v2114 = vpop.f32.mrb[0].mxu0
        %v2115 = vadd.f32 %v2005, %v2114
        %v2116 = vpop.f32.mrb[0].mxu0
        %2117 = vmatprep.mubr.f32.mxu0 0.0
        %v2118 = vand.u32 %v1732, 4294901760
        %v2119 = vsub.f32 %v1732, %v2118
        %2120 = vmatmul.mubr.f32.gmra.mrb[0].mxu0 %v2119
        %v2121 = vpop.f32.mrb[0].mxu0
        %v2122 = vadd.f32 %v2011, %v2121
        %v2123 = vpop.f32.mrb[0].mxu0
        %2124 = vdwg.mxu0
        %2125 = vmatprep.subr.mxu0 0.0
        %v2126 = vand.u32 %v1733, 4294901760
        %2127 = vmatpush1.msra.mxu0 %v2126
        %2128 = vmatprep.subr.mxu0 0.0
        %v2129 = vand.u32 %v1734, 4294901760
        %2130 = vmatpush1.msra.mxu0 %v2129
        %2131 = vmatprep.subr.mxu0 0.0
        %v2132 = vand.u32 %v1735, 4294901760
        %2133 = vmatpush1.msra.mxu0 %v2132
        %2134 = vmatprep.subr.mxu0 0.0
        %v2135 = vand.u32 %v1736, 4294901760
        %2136 = vmatpush1.msra.mxu0 %v2135
        %2137 = vmatprep.subr.mxu0 0.0
        %v2138 = vand.u32 %v1737, 4294901760
        %2139 = vmatpush1.msra.mxu0 %v2138
        %2140 = vmatprep.subr.mxu0 0.0
        %v2141 = vand.u32 %v1738, 4294901760
        %2142 = vmatpush1.msra.mxu0 %v2141
        %2143 = vmatprep.subr.mxu0 0.0
        %v2144 = vand.u32 %v1739, 4294901760
        %2145 = vmatpush1.msra.mxu0 %v2144
        %2146 = vmatprep.subr.mxu0 0.0
        %v2147 = vand.u32 %v1740, 4294901760
        %2148 = vmatpush1.msra.mxu0 %v2147
        %2149 = vmatprep.subr.mxu0 0.0
        %v2150 = vand.u32 %v1741, 4294901760
        %2151 = vmatpush1.msra.mxu0 %v2150
        %2152 = vmatprep.subr.mxu0 0.0
        %v2153 = vand.u32 %v1742, 4294901760
        %2154 = vmatpush1.msra.mxu0 %v2153
        %2155 = vmatprep.subr.mxu0 0.0
        %v2156 = vand.u32 %v1743, 4294901760
        %2157 = vmatpush1.msra.mxu0 %v2156
        %2158 = vmatprep.subr.mxu0 0.0
        %v2159 = vand.u32 %v1744, 4294901760
        %2160 = vmatpush1.msra.mxu0 %v2159
        %2161 = vmatprep.subr.mxu0 0.0
        %v2162 = vand.u32 %v1745, 4294901760
        %2163 = vmatpush1.msra.mxu0 %v2162
        %2164 = vmatprep.subr.mxu0 0.0
        %v2165 = vand.u32 %v1746, 4294901760
        %2166 = vmatpush1.msra.mxu0 %v2165
        %2167 = vmatprep.subr.mxu0 0.0
        %v2168 = vand.u32 %v1747, 4294901760
        %2169 = vmatpush1.msra.mxu0 %v2168
        %2170 = vmatprep.subr.mxu0 0.0
        %v2171 = vand.u32 %v1748, 4294901760
        %2172 = vmatpush1.msra.mxu0 %v2171
        %2173 = vmatprep.subr.mxu0 0.0
        %2174 = vmatpush1.msra.mxu0 0.0
        %2175 = vmatprep.subr.mxu0 0.0
        %2176 = vmatpush1.msra.mxu0 0.0
        %2177 = vmatprep.subr.mxu0 0.0
        %2178 = vmatpush1.msra.mxu0 0.0
        %2179 = vmatprep.subr.mxu0 0.0
        %2180 = vmatpush1.msra.mxu0 0.0
        %2181 = vmatprep.subr.mxu0 0.0
        %2182 = vmatpush1.msra.mxu0 0.0
        %2183 = vmatprep.subr.mxu0 0.0
        %2184 = vmatpush1.msra.mxu0 0.0
        %2185 = vmatprep.subr.mxu0 0.0
        %2186 = vmatpush1.msra.mxu0 0.0
        %2187 = vmatprep.subr.mxu0 0.0
        %2188 = vmatpush1.msra.mxu0 0.0
        %2189 = vmatprep.subr.mxu0 0.0
        %2190 = vmatpush1.msra.mxu0 0.0
        %2191 = vmatprep.subr.mxu0 0.0
        %2192 = vmatpush1.msra.mxu0 0.0
        %2193 = vmatprep.subr.mxu0 0.0
        %2194 = vmatpush1.msra.mxu0 0.0
        %2195 = vmatprep.subr.mxu0 0.0
        %2196 = vmatpush1.msra.mxu0 0.0
        %2197 = vmatprep.subr.mxu0 0.0
        %2198 = vmatpush1.msra.mxu0 0.0
        %2199 = vmatprep.subr.mxu0 0.0
        %2200 = vmatpush1.msra.mxu0 0.0
        %2201 = vmatprep.subr.mxu0 0.0
        %2202 = vmatpush1.msra.mxu0 0.0
        %2203 = vmatprep.subr.mxu0 0.0
        %2204 = vmatpush1.msra.mxu0 0.0
        %2205 = vmatprep.mubr.f32.mxu0 0.0
        %v2206 = vand.u32 %v1731, 4294901760
        %v2207 = vsub.f32 %v1731, %v2206
        %v2208 = vand.u32 %v2207, 4294901760
        %2209 = vmatmul.mubr.f32.gmra.mrb[0].mxu0 %v2208
        %v2210 = vpop.f32.mrb[0].mxu0
        %v2211 = vadd.f32 %v2115, %v2210
        %v2212 = vpop.f32.mrb[0].mxu0
        %2213 = vmatprep.mubr.f32.mxu0 0.0
        %v2214 = vand.u32 %v1732, 4294901760
        %v2215 = vsub.f32 %v1732, %v2214
        %v2216 = vand.u32 %v2215, 4294901760
        %2217 = vmatmul.mubr.f32.gmra.mrb[0].mxu0 %v2216
        %v2218 = vpop.f32.mrb[0].mxu0
        %v2219 = vadd.f32 %v2122, %v2218
        %v2220 = vpop.f32.mrb[0].mxu0
        %2221 = vdwg.mxu0
        %2222 = vmatprep.subr.mxu0 0.0
        %v2223 = vand.u32 %v1733, 4294901760
        %v2224 = vsub.f32 %v1733, %v2223
        %v2225 = vand.u32 %v2224, 4294901760
        %2226 = vmatpush1.msra.mxu0 %v2225
        %2227 = vmatprep.subr.mxu0 0.0
        %v2228 = vand.u32 %v1734, 4294901760
        %v2229 = vsub.f32 %v1734, %v2228
        %v2230 = vand.u32 %v2229, 4294901760
        %2231 = vmatpush1.msra.mxu0 %v2230
        %2232 = vmatprep.subr.mxu0 0.0
        %v2233 = vand.u32 %v1735, 4294901760
        %v2234 = vsub.f32 %v1735, %v2233
        %v2235 = vand.u32 %v2234, 4294901760
        %2236 = vmatpush1.msra.mxu0 %v2235
        %2237 = vmatprep.subr.mxu0 0.0
        %v2238 = vand.u32 %v1736, 4294901760
        %v2239 = vsub.f32 %v1736, %v2238
        %v2240 = vand.u32 %v2239, 4294901760
        %2241 = vmatpush1.msra.mxu0 %v2240
        %2242 = vmatprep.subr.mxu0 0.0
        %v2243 = vand.u32 %v1737, 4294901760
        %v2244 = vsub.f32 %v1737, %v2243
        %v2245 = vand.u32 %v2244, 4294901760
        %2246 = vmatpush1.msra.mxu0 %v2245
        %2247 = vmatprep.subr.mxu0 0.0
        %v2248 = vand.u32 %v1738, 4294901760
        %v2249 = vsub.f32 %v1738, %v2248
        %v2250 = vand.u32 %v2249, 4294901760
        %2251 = vmatpush1.msra.mxu0 %v2250
        %2252 = vmatprep.subr.mxu0 0.0
        %v2253 = vand.u32 %v1739, 4294901760
        %v2254 = vsub.f32 %v1739, %v2253
        %v2255 = vand.u32 %v2254, 4294901760
        %2256 = vmatpush1.msra.mxu0 %v2255
        %2257 = vmatprep.subr.mxu0 0.0
        %v2258 = vand.u32 %v1740, 4294901760
        %v2259 = vsub.f32 %v1740, %v2258
        %v2260 = vand.u32 %v2259, 4294901760
        %2261 = vmatpush1.msra.mxu0 %v2260
        %2262 = vmatprep.subr.mxu0 0.0
        %v2263 = vand.u32 %v1741, 4294901760
        %v2264 = vsub.f32 %v1741, %v2263
        %v2265 = vand.u32 %v2264, 4294901760
        %2266 = vmatpush1.msra.mxu0 %v2265
        %2267 = vmatprep.subr.mxu0 0.0
        %v2268 = vand.u32 %v1742, 4294901760
        %v2269 = vsub.f32 %v1742, %v2268
        %v2270 = vand.u32 %v2269, 4294901760
        %2271 = vmatpush1.msra.mxu0 %v2270
        %2272 = vmatprep.subr.mxu0 0.0
        %v2273 = vand.u32 %v1743, 4294901760
        %v2274 = vsub.f32 %v1743, %v2273
        %v2275 = vand.u32 %v2274, 4294901760
        %2276 = vmatpush1.msra.mxu0 %v2275
        %2277 = vmatprep.subr.mxu0 0.0
        %v2278 = vand.u32 %v1744, 4294901760
        %v2279 = vsub.f32 %v1744, %v2278
        %v2280 = vand.u32 %v2279, 4294901760
        %2281 = vmatpush1.msra.mxu0 %v2280
        %2282 = vmatprep.subr.mxu0 0.0
        %v2283 = vand.u32 %v1745, 4294901760
        %v2284 = vsub.f32 %v1745, %v2283
        %v2285 = vand.u32 %v2284, 4294901760
        %2286 = vmatpush1.msra.mxu0 %v2285
        %2287 = vmatprep.subr.mxu0 0.0
        %v2288 = vand.u32 %v1746, 4294901760
        %v2289 = vsub.f32 %v1746, %v2288
        %v2290 = vand.u32 %v2289, 4294901760
        %2291 = vmatpush1.msra.mxu0 %v2290
        %2292 = vmatprep.subr.mxu0 0.0
        %v2293 = vand.u32 %v1747, 4294901760
        %v2294 = vsub.f32 %v1747, %v2293
        %v2295 = vand.u32 %v2294, 4294901760
        %2296 = vmatpush1.msra.mxu0 %v2295
        %2297 = vmatprep.subr.mxu0 0.0
        %v2298 = vand.u32 %v1748, 4294901760
        %v2299 = vsub.f32 %v1748, %v2298
        %v2300 = vand.u32 %v2299, 4294901760
        %2301 = vmatpush1.msra.mxu0 %v2300
        %2302 = vmatprep.subr.mxu0 0.0
        %2303 = vmatpush1.msra.mxu0 0.0
        %2304 = vmatprep.subr.mxu0 0.0
        %2305 = vmatpush1.msra.mxu0 0.0
        %2306 = vmatprep.subr.mxu0 0.0
        %2307 = vmatpush1.msra.mxu0 0.0
        %2308 = vmatprep.subr.mxu0 0.0
        %2309 = vmatpush1.msra.mxu0 0.0
        %2310 = vmatprep.subr.mxu0 0.0
        %2311 = vmatpush1.msra.mxu0 0.0
        %2312 = vmatprep.subr.mxu0 0.0
        %2313 = vmatpush1.msra.mxu0 0.0
        %2314 = vmatprep.subr.mxu0 0.0
        %2315 = vmatpush1.msra.mxu0 0.0
        %2316 = vmatprep.subr.mxu0 0.0
        %2317 = vmatpush1.msra.mxu0 0.0
        %2318 = vmatprep.subr.mxu0 0.0
        %2319 = vmatpush1.msra.mxu0 0.0
        %2320 = vmatprep.subr.mxu0 0.0
        %2321 = vmatpush1.msra.mxu0 0.0
        %2322 = vmatprep.subr.mxu0 0.0
        %2323 = vmatpush1.msra.mxu0 0.0
        %2324 = vmatprep.subr.mxu0 0.0
        %2325 = vmatpush1.msra.mxu0 0.0
        %2326 = vmatprep.subr.mxu0 0.0
        %2327 = vmatpush1.msra.mxu0 0.0
        %2328 = vmatprep.subr.mxu0 0.0
        %2329 = vmatpush1.msra.mxu0 0.0
        %2330 = vmatprep.subr.mxu0 0.0
        %2331 = vmatpush1.msra.mxu0 0.0
        %2332 = vmatprep.subr.mxu0 0.0
        %2333 = vmatpush1.msra.mxu0 0.0
        %2334 = vmatprep.mubr.f32.mxu0 0.0
        %v2335 = vand.u32 %v1731, 4294901760
        %2336 = vmatmul.mubr.f32.gmra.mrb[0].mxu0 %v2335
        %v2337 = vpop.f32.mrb[0].mxu0
        %v2338 = vadd.f32 %v2211, %v2337
        %v2339 = vpop.f32.mrb[0].mxu0
        %2340 = vmatprep.mubr.f32.mxu0 0.0
        %v2341 = vand.u32 %v1732, 4294901760
        %2342 = vmatmul.mubr.f32.gmra.mrb[0].mxu0 %v2341
        %v2343 = vpop.f32.mrb[0].mxu0
        %v2344 = vadd.f32 %v2219, %v2343
        %v2345 = vpop.f32.mrb[0].mxu0
        %2346 = vdwg.mxu0
        %2347 = vmatprep.subr.mxu0 0.0
        %v2348 = vand.u32 %v1733, 4294901760
        %2349 = vmatpush1.msra.mxu0 %v2348
        %2350 = vmatprep.subr.mxu0 0.0
        %v2351 = vand.u32 %v1734, 4294901760
        %2352 = vmatpush1.msra.mxu0 %v2351
        %2353 = vmatprep.subr.mxu0 0.0
        %v2354 = vand.u32 %v1735, 4294901760
        %2355 = vmatpush1.msra.mxu0 %v2354
        %2356 = vmatprep.subr.mxu0 0.0
        %v2357 = vand.u32 %v1736, 4294901760
        %2358 = vmatpush1.msra.mxu0 %v2357
        %2359 = vmatprep.subr.mxu0 0.0
        %v2360 = vand.u32 %v1737, 4294901760
        %2361 = vmatpush1.msra.mxu0 %v2360
        %2362 = vmatprep.subr.mxu0 0.0
        %v2363 = vand.u32 %v1738, 4294901760
        %2364 = vmatpush1.msra.mxu0 %v2363
        %2365 = vmatprep.subr.mxu0 0.0
        %v2366 = vand.u32 %v1739, 4294901760
        %2367 = vmatpush1.msra.mxu0 %v2366
        %2368 = vmatprep.subr.mxu0 0.0
        %v2369 = vand.u32 %v1740, 4294901760
        %2370 = vmatpush1.msra.mxu0 %v2369
        %2371 = vmatprep.subr.mxu0 0.0
        %v2372 = vand.u32 %v1741, 4294901760
        %2373 = vmatpush1.msra.mxu0 %v2372
        %2374 = vmatprep.subr.mxu0 0.0
        %v2375 = vand.u32 %v1742, 4294901760
        %2376 = vmatpush1.msra.mxu0 %v2375
        %2377 = vmatprep.subr.mxu0 0.0
        %v2378 = vand.u32 %v1743, 4294901760
        %2379 = vmatpush1.msra.mxu0 %v2378
        %2380 = vmatprep.subr.mxu0 0.0
        %v2381 = vand.u32 %v1744, 4294901760
        %2382 = vmatpush1.msra.mxu0 %v2381
        %2383 = vmatprep.subr.mxu0 0.0
        %v2384 = vand.u32 %v1745, 4294901760
        %2385 = vmatpush1.msra.mxu0 %v2384
        %2386 = vmatprep.subr.mxu0 0.0
        %v2387 = vand.u32 %v1746, 4294901760
        %2388 = vmatpush1.msra.mxu0 %v2387
        %2389 = vmatprep.subr.mxu0 0.0
        %v2390 = vand.u32 %v1747, 4294901760
        %2391 = vmatpush1.msra.mxu0 %v2390
        %2392 = vmatprep.subr.mxu0 0.0
        %v2393 = vand.u32 %v1748, 4294901760
        %2394 = vmatpush1.msra.mxu0 %v2393
        %2395 = vmatprep.subr.mxu0 0.0
        %2396 = vmatpush1.msra.mxu0 0.0
        %2397 = vmatprep.subr.mxu0 0.0
        %2398 = vmatpush1.msra.mxu0 0.0
        %2399 = vmatprep.subr.mxu0 0.0
        %2400 = vmatpush1.msra.mxu0 0.0
        %2401 = vmatprep.subr.mxu0 0.0
        %2402 = vmatpush1.msra.mxu0 0.0
        %2403 = vmatprep.subr.mxu0 0.0
        %2404 = vmatpush1.msra.mxu0 0.0
        %2405 = vmatprep.subr.mxu0 0.0
        %2406 = vmatpush1.msra.mxu0 0.0
        %2407 = vmatprep.subr.mxu0 0.0
        %2408 = vmatpush1.msra.mxu0 0.0
        %2409 = vmatprep.subr.mxu0 0.0
        %2410 = vmatpush1.msra.mxu0 0.0
        %2411 = vmatprep.subr.mxu0 0.0
        %2412 = vmatpush1.msra.mxu0 0.0
        %2413 = vmatprep.subr.mxu0 0.0
        %2414 = vmatpush1.msra.mxu0 0.0
        %2415 = vmatprep.subr.mxu0 0.0
        %2416 = vmatpush1.msra.mxu0 0.0
        %2417 = vmatprep.subr.mxu0 0.0
        %2418 = vmatpush1.msra.mxu0 0.0
        %2419 = vmatprep.subr.mxu0 0.0
        %2420 = vmatpush1.msra.mxu0 0.0
        %2421 = vmatprep.subr.mxu0 0.0
        %2422 = vmatpush1.msra.mxu0 0.0
        %2423 = vmatprep.subr.mxu0 0.0
        %2424 = vmatpush1.msra.mxu0 0.0
        %2425 = vmatprep.subr.mxu0 0.0
        %2426 = vmatpush1.msra.mxu0 0.0
        %2427 = vmatprep.mubr.f32.mxu0 0.0
        %v2428 = vand.u32 %v1731, 4294901760
        %2429 = vmatmul.mubr.f32.gmra.mrb[0].mxu0 %v2428
        %v2430 = vpop.f32.mrb[0].mxu0
        %v2431 = vadd.f32 %v2338, %v2430
        %v2432 = vpop.f32.mrb[0].mxu0
        %2433 = vmatprep.mubr.f32.mxu0 0.0
        %v2434 = vand.u32 %v1732, 4294901760
        %2435 = vmatmul.mubr.f32.gmra.mrb[0].mxu0 %v2434
        %v2436 = vpop.f32.mrb[0].mxu0
        %v2437 = vadd.f32 %v2344, %v2436
        %v2438 = vpop.f32.mrb[0].mxu0
        %2439 = vdwg.mxu0
        %vm2440 = vcmask 64512
        %v2441 = vsel %vm2440, %v2431, -inf
        %2442 = vmax.xlane.f32.xlu0 %v2441
        %v2443 = vpop.xlane.xlu0 %2442
        %v2444 = vsel %vm2440, %v2437, -inf
        %2445 = vmax.xlane.f32.xlu0 %v2444
        %v2446 = vpop.xlane.xlu0 %2445
        %v2447 = vsub.f32 %v2431, %v2443
        %v2448 = vsub.f32 %v2437, %v2446
        %v2449 = vmul.f32 %v2447, 1.442695
        %v2450 = vpow.pop %v2449
        %v2451 = vmul.f32 %v2448, 1.442695
        %v2452 = vpow.pop %v2451
        %v2453 = vsel %vm2440, %v2450, 0.0
        %2454 = vadd.xlane.f32.xlu0 %v2453
        %v2455 = vpop.xlane.xlu0 %2454
        %v2456 = vsel %vm2440, %v2452, 0.0
        %2457 = vadd.xlane.f32.xlu0 %v2456
        %v2458 = vpop.xlane.xlu0 %2457
        %v2459 = vrcp.pop %v2455
        %v2460 = vmul.f32 1.0, %v2459
        %v2461 = vrcp.pop %v2458
        %v2462 = vmul.f32 1.0, %v2461
        %v2463 = vmul.f32 %v2450, %v2460
        %v2464 = vmul.f32 %v2452, %v2462
        %2465 = vst.msk [vmem:[%s313] sm:$0xff] %vm2440, %v2463
        %2466 = vst.msk [vmem:[%s313 + $0x8] sm:$0xff] %vm2440, %v2464
        %s2467 = sand.u32 %s182, 1
        %s2468 = sand.u32 %s182, 1
        %s2469 = smul.addr %s2468, 16
        %s2470 = scalar_lea.vmem [#allocation6], %s2469
        // Predicated region
        $region57: #{tpu_custom_call.1} parent=47 // pred_check
          %p2471 = pneg %p192
        $region58: #{tpu_custom_call.1} parent=47 // pred_check_branch
          %2473 = sbr.rel (%p2471) target = $region60
        $region59: #{tpu_custom_call.1} parent=47 // pred_region
          %s2474 = smul.u32 2, %s22
          %s2475 = ssub.s32 7, %s2474
          %p2476 = scmp.lt.s32.totalorder %s2475, 2
          %s2477 = scalar_select %p2476, %s2475, 2
          %s2478 = smul.u32 128, %s2477
          %p2479 = scmp.ne.s32.totalorder 0, %s2478
          %s2480 = smul.addr %s2474, 8
          %s2481 = scalar_lea.vmem %s7, %s2480
          // Predicated region
          $region61: #{tpu_custom_call.1} parent=59 // pred_check
            %p2482 = pneg %p2479
          $region62: #{tpu_custom_call.1} parent=59 // pred_check_branch
            %2484 = sbr.rel (%p2482) target = $region64
          $region63: #{tpu_custom_call.1} parent=59 // pred_region
            // Predicated region
            $region65: #{tpu_custom_call.1} parent=63 // pred_check
              _
            $region66: #{tpu_custom_call.1} parent=63 // pred_check_branch
              %2486 = sbr.rel (0) target = $region68
            $region67: #{tpu_custom_call.1} parent=63 // pred_region
              // Predicated region
              $region87: #{tpu_custom_call.1} parent=67 // pred_check
                _
              $region88: #{tpu_custom_call.1} parent=67 // pred_check_branch
                %2537 = sbr.rel (0) target = $region90
              $region89: #{tpu_custom_call.1} parent=67 // pred_region
                %s2538 = sshrl.u32 %s2477, 1
                // While loop
                $region91: #{tpu_custom_call.1} parent=89 // loop_pre_header
                  _
                $region92: #{tpu_custom_call.1} parent=89 // loop_header
                  %s2540 = sphi 0, %s2542
                  %p2541 = scmp.ge.s32.totalorder %s2540, %s2538
                  %s2545 = sphi 0, %s2554
                  %s2546 = sphi %s2470, %s2557
                  %s2547 = sphi %s2481, %s2558
                $region93: #{tpu_custom_call.1} parent=89 // loop_header_branch
                  %2544 = sbr.rel (%p2541) target = $region97
                $region94: #{tpu_custom_call.1} parent=89 // loop_body
                  %v2548 = vld [vmem:[%s2546] sm:$0xff]
                  %2549 = vst [vmem:[%s2547] sm:$0xff] %v2548
                  %v2550 = vld [vmem:[%s2546 + $0x8] sm:$0xff]
                  %2551 = vst [vmem:[%s2547 + $0x8] sm:$0xff] %v2550
                  %s2552 = sadd.s32 1, %s2545
                  %p2553 = scmp.ge.s32.totalorder %s2552, %s2538
                  %s2554 = scalar_select %p2553, 0, %s2552
                  %s2555 = smul.u32 %s2554, 16
                  %s2556 = smul.u32 %s2554, 16
                  %s2557 = scalar_lea.vmem %s2470, %s2555 [#allocation6]
                  %s2558 = scalar_lea.vmem %s2481, %s2556
                $region95: #{tpu_custom_call.1} parent=89 // loop_footer
                  %s2542 = sadd.s32 %s2540, 1
                $region96: #{tpu_custom_call.1} parent=89 // loop_footer_branch
                  %2539 = sbr.rel target = $region92
                $region97: #{tpu_custom_call.1} parent=89 // loop_exit
                  _
                %s2559 = sshrl.u32 %s2477, 1
                %s2560 = sand.u32 %s2477, 1
                %s2561 = smul.u32 %s2559, 2
                %s2562 = smul.u32 8, %s2561
                %s2563 = scalar_lea.vmem %s2470, %s2562 [#allocation6]
                %s2564 = smul.u32 8, %s2561
                %s2565 = scalar_lea.vmem %s2481, %s2564
                // While loop
                $region98: #{tpu_custom_call.1} parent=89 // loop_pre_header
                  _
                $region99: #{tpu_custom_call.1} parent=89 // loop_header
                  %s2567 = sphi 0, %s2569
                  %p2568 = scmp.ge.s32.totalorder %s2567, %s2560
                  %s2572 = sphi 0, %s2579
                  %s2573 = sphi %s2563, %s2582
                  %s2574 = sphi %s2565, %s2583
                $region100: #{tpu_custom_call.1} parent=89 // loop_header_branch
                  %2571 = sbr.rel (%p2568) target = $region104
                $region101: #{tpu_custom_call.1} parent=89 // loop_body
                  %v2575 = vld [vmem:[%s2573] sm:$0xff]
                  %2576 = vst [vmem:[%s2574] sm:$0xff] %v2575
                  %s2577 = sadd.s32 1, %s2572
                  %p2578 = scmp.ge.s32.totalorder %s2577, %s2560
                  %s2579 = scalar_select %p2578, 0, %s2577
                  %s2580 = smul.u32 %s2579, 8
                  %s2581 = smul.u32 %s2579, 8
                  %s2582 = scalar_lea.vmem %s2563, %s2580 [#allocation6]
                  %s2583 = scalar_lea.vmem %s2565, %s2581
                $region102: #{tpu_custom_call.1} parent=89 // loop_footer
                  %s2569 = sadd.s32 %s2567, 1
                $region103: #{tpu_custom_call.1} parent=89 // loop_footer_branch
                  %2566 = sbr.rel target = $region99
                $region104: #{tpu_custom_call.1} parent=89 // loop_exit
                  _
              $region90: #{tpu_custom_call.1} parent=67 // pred_fallthru
                _
              // Predicated region
              $region105: #{tpu_custom_call.1} parent=67 // pred_check
                _
              $region106: #{tpu_custom_call.1} parent=67 // pred_check_branch
                %2585 = sbr.rel target = $region108
              $region107: #{tpu_custom_call.1} parent=67 // pred_region
                _
              $region108: #{tpu_custom_call.1} parent=67 // pred_fallthru
                _
            $region68: #{tpu_custom_call.1} parent=63 // pred_fallthru
              _
            // Predicated region
            $region69: #{tpu_custom_call.1} parent=63 // pred_check
              _
            $region70: #{tpu_custom_call.1} parent=63 // pred_check_branch
              %2488 = sbr.rel target = $region72
            $region71: #{tpu_custom_call.1} parent=63 // pred_region
              %s2490 = sshrl.u32 %s2477, 1
              // While loop
              $region73: #{tpu_custom_call.1} parent=71 // loop_pre_header
                _
              $region74: #{tpu_custom_call.1} parent=71 // loop_header
                %s2492 = sphi 0, %s2494
                %p2493 = scmp.ge.s32.totalorder %s2492, %s2490
                %s2497 = sphi 0, %s2506
                %s2498 = sphi %s2470, %s2509
                %s2499 = sphi %s2481, %s2510
              $region75: #{tpu_custom_call.1} parent=71 // loop_header_branch
                %2496 = sbr.rel (%p2493) target = $region79
              $region76: #{tpu_custom_call.1} parent=71 // loop_body
                %v2500 = vld [vmem:[%s2498] sm:$0xff]
                %2501 = vst [vmem:[%s2499] sm:$0xff] %v2500
                %v2502 = vld [vmem:[%s2498 + $0x8] sm:$0xff]
                %2503 = vst [vmem:[%s2499 + $0x8] sm:$0xff] %v2502
                %s2504 = sadd.s32 1, %s2497
                %p2505 = scmp.ge.s32.totalorder %s2504, %s2490
                %s2506 = scalar_select %p2505, 0, %s2504
                %s2507 = smul.u32 %s2506, 16
                %s2508 = smul.u32 %s2506, 16
                %s2509 = scalar_lea.vmem %s2470, %s2507 [#allocation6]
                %s2510 = scalar_lea.vmem %s2481, %s2508
              $region77: #{tpu_custom_call.1} parent=71 // loop_footer
                %s2494 = sadd.s32 %s2492, 1
              $region78: #{tpu_custom_call.1} parent=71 // loop_footer_branch
                %2491 = sbr.rel target = $region74
              $region79: #{tpu_custom_call.1} parent=71 // loop_exit
                _
              %s2511 = sshrl.u32 %s2477, 1
              %s2512 = sand.u32 %s2477, 1
              %s2513 = smul.u32 %s2511, 2
              %s2514 = smul.u32 8, %s2513
              %s2515 = scalar_lea.vmem %s2470, %s2514 [#allocation6]
              %s2516 = smul.u32 8, %s2513
              %s2517 = scalar_lea.vmem %s2481, %s2516
              // While loop
              $region80: #{tpu_custom_call.1} parent=71 // loop_pre_header
                _
              $region81: #{tpu_custom_call.1} parent=71 // loop_header
                %s2519 = sphi 0, %s2521
                %p2520 = scmp.ge.s32.totalorder %s2519, %s2512
                %s2524 = sphi 0, %s2531
                %s2525 = sphi %s2515, %s2534
                %s2526 = sphi %s2517, %s2535
              $region82: #{tpu_custom_call.1} parent=71 // loop_header_branch
                %2523 = sbr.rel (%p2520) target = $region86
              $region83: #{tpu_custom_call.1} parent=71 // loop_body
                %v2527 = vld [vmem:[%s2525] sm:$0xff]
                %2528 = vst [vmem:[%s2526] sm:$0xff] %v2527
                %s2529 = sadd.s32 1, %s2524
                %p2530 = scmp.ge.s32.totalorder %s2529, %s2512
                %s2531 = scalar_select %p2530, 0, %s2529
                %s2532 = smul.u32 %s2531, 8
                %s2533 = smul.u32 %s2531, 8
                %s2534 = scalar_lea.vmem %s2515, %s2532 [#allocation6]
                %s2535 = scalar_lea.vmem %s2517, %s2533
              $region84: #{tpu_custom_call.1} parent=71 // loop_footer
                %s2521 = sadd.s32 %s2519, 1
              $region85: #{tpu_custom_call.1} parent=71 // loop_footer_branch
                %2518 = sbr.rel target = $region81
              $region86: #{tpu_custom_call.1} parent=71 // loop_exit
                _
            $region72: #{tpu_custom_call.1} parent=63 // pred_fallthru
              _
          $region64: #{tpu_custom_call.1} parent=59 // pred_fallthru
            _
          %2586 = vnop
        $region60: #{tpu_custom_call.1} parent=47 // pred_fallthru
          _
      $region48: #{tpu_custom_call.1} parent=5 // pred_fallthru
        _
      %p2587 = scmp.le.s32.totalorder 2, %s17
      // Predicated region
      $region109: #{tpu_custom_call.1} parent=5 // pred_check
        %p2588 = pneg %p2587
      $region110: #{tpu_custom_call.1} parent=5 // pred_check_branch
        %2590 = sbr.rel (%p2588) target = $region112
      $region111: #{tpu_custom_call.1} parent=5 // pred_region
        %s2591 = ssub.s32 %s17, 2
        // Predicated region
        $region113: #{tpu_custom_call.1} parent=111 // pred_check
          %p2592 = pneg %p198
        $region114: #{tpu_custom_call.1} parent=111 // pred_check_branch
          %2594 = sbr.rel (%p2592) target = $region116
        $region115: #{tpu_custom_call.1} parent=111 // pred_region
          %s2595 = sand.u32 %s183, 1
          %s2596 = sand.u32 %s183, 1
          %s2597 = smul.addr %s2596, 16
          %s2598 = scalar_lea.vmem [#allocation6], %s2597
        $region116: #{tpu_custom_call.1} parent=111 // pred_fallthru
          _
      $region112: #{tpu_custom_call.1} parent=5 // pred_fallthru
        _
    $region6: #{tpu_custom_call.1} parent=1 // loop_footer
      %s21 = sadd.s32 1, %s17
    $region7: #{tpu_custom_call.1} parent=1 // loop_footer_branch
      %16 = sbr.rel target = $region3
    $region8: #{tpu_custom_call.1} parent=1 // loop_exit
      _
    %2599 = vsyncpa [#allocation3], 1
    %s2600 = scalar_lea.sflag [#allocation3], 1
    %2601 = vsyncpa %s2600, 1
    %2602 = vsyncpa [#allocation5], 1

</llo_original>
